<compile_context>
chip_gen: v7x
topology: tpu7x:2x2x1
jax: 0.10.0
libtpu: 0.0.40
codegen_flags: <defaults>
</compile_context>

<pallas_src>
import jax
import jax.numpy as jnp
from jax import lax
from jax.experimental import pallas as pl
from jax.experimental.pallas import tpu as pltpu

_F32 = jnp.float32


def _round_up(v, m):
    return (v + m - 1) // m * m


def _pick_lane_tile(n, max_tile):
    """Lane tile: multiple of 128, <= max_tile; keep ~8 grid steps at large B."""
    max_tile = _round_up(max(max_tile, 128), 128)
    full = _round_up(max(n, 1), 128)
    per8 = _round_up(-(-n // 8), 128)          # ~8 grid steps
    if full <= max_tile:
        # Single big tile unless splitting still leaves >= 1024 lanes per step
        # (keeps both v7x TensorCores busy without step overhead dominating).
        return per8 if per8 >= 1024 else full
    return max(1024, min(max_tile, per8))


def _finish(zT, w2pT_ref, b2pT_ref, c_row_ref, oT_ref):
    """Shared tail: tanh, output matmul, analytic trace, lane-dense store."""
    hT = jnp.tanh(zT)                                                    # (H, TB)
    xoT = jnp.dot(w2pT_ref[...], hT,
                  precision=lax.Precision.HIGHEST,
                  preferred_element_type=_F32) + b2pT_ref[...]           # (D, TB)
    # trJ on the MXU: (1,H) @ (H,TB) instead of a cross-sublane reduction.
    trJT = jnp.dot(c_row_ref[...], 1.0 - hT * hT,
                   precision=lax.Precision.HIGHEST,
                   preferred_element_type=_F32)                          # (1, TB)
    oT_ref[...] = xoT              # row 0 of xoT is identically zero (padded weights)
    oT_ref[0:1, :] = -trJT         # overwrite row 0 with -trace


def _cnf_kernel_t(xT_ref, w1xT_ref, beffT_ref, w2pT_ref, b2pT_ref, c_row_ref, oT_ref):
    # Transposed-state path: xT_ref is (D, TB), batch on lanes.
    zT = jnp.dot(w1xT_ref[...], xT_ref[...],
                 precision=lax.Precision.HIGHEST,
                 preferred_element_type=_F32) + beffT_ref[...]           # (H, TB)
    _finish(zT, w2pT_ref, b2pT_ref, c_row_ref, oT_ref)


def _cnf_kernel_nat(x_ref, w1xT_ref, beffT_ref, w2pT_ref, b2pT_ref, c_row_ref, oT_ref):
    # Natural-layout input: x_ref is (TB, D); layout change fused into the matmul
    # ("A @ B^T" contraction), so no wrapper-side input transpose is needed.
    zT = lax.dot_general(w1xT_ref[...], x_ref[...],
                         (((1,), (1,)), ((), ())),
                         precision=lax.Precision.HIGHEST,
                         preferred_element_type=_F32) + beffT_ref[...]   # (H, TB)
    _finish(zT, w2pT_ref, b2pT_ref, c_row_ref, oT_ref)


def make_cnf(W1, b1, W2, b2, *, tile_b=8192, tile_b_nat=4096, propagate_x=False):
    """Precompute/cache packed weights; return (cnf, cnf_t).

    cnf(t, x):   natural (B, D) interface (matches PyTorch CNF.forward).
    cnf_t(t, xT): transposed-state interface, xT/out are (D, B) -- preferred for
                  ODE-integrator loops (no layout changes per step).
    """
    W1 = jnp.asarray(W1, _F32); b1 = jnp.asarray(b1, _F32)
    W2 = jnp.asarray(W2, _F32); b2 = jnp.asarray(b2, _F32)
    D, H = W1.shape            # D = d + 1
    d = D - 1
    assert W2.shape == (H, d) and b1.shape == (H,) and b2.shape == (d,)

    # Cached packed (transposed) parameters -- computed once, not per ODE step.
    w1xT = jnp.concatenate([jnp.zeros((H, 1), _F32), W1[:d].T], axis=1)   # (H, D)
    w1tT = W1[d].reshape(H, 1)                                            # (H, 1)
    b1T = b1.reshape(H, 1)                                                # (H, 1)
    w2pT = jnp.concatenate([jnp.zeros((1, H), _F32), W2.T], axis=0)       # (D, H)
    b2pT = jnp.concatenate([jnp.zeros((1,), _F32), b2]).reshape(D, 1)     # (D, 1)
    c_row = jnp.sum(W1[:d] * W2.T, axis=0).reshape(1, H)                  # (1, H)

    const_specs = [
        pl.BlockSpec((H, D), lambda i: (0, 0)),   # w1xT   (resident, fetched once)
        pl.BlockSpec((H, 1), lambda i: (0, 0)),   # beffT
        pl.BlockSpec((D, H), lambda i: (0, 0)),   # w2pT
        pl.BlockSpec((D, 1), lambda i: (0, 0)),   # b2pT
        pl.BlockSpec((1, H), lambda i: (0, 0)),   # c_row
    ]
    cparams = pltpu.CompilerParams(
        dimension_semantics=("parallel",),        # megacore sharding on v7x
    )

    def _call(kernel, x_arr, in_spec, TB, Bp, beffT):
        return pl.pallas_call(
            kernel,
            out_shape=jax.ShapeDtypeStruct((D, Bp), _F32),
            grid_spec=pltpu.PrefetchScalarGridSpec(
                num_scalar_prefetch=0,
                grid=(Bp // TB,),
                in_specs=[in_spec] + const_specs,
                out_specs=pl.BlockSpec((D, TB), lambda i: (0, i)),
            ),
            compiler_params=cparams,
        )(x_arr, w1xT, beffT, w2pT, b2pT, c_row)

    @jax.jit
    def cnf_t(t, xT):
        """Transposed-state path: xT is (D, B) -> (D, B); no layout changes."""
        assert xT.shape[0] == D
        B = xT.shape[1]
        TB = _pick_lane_tile(B, tile_b)
        Bp = _round_up(B, TB)
        xTp = xT.astype(_F32)
        if Bp != B:
            xTp = jnp.pad(xTp, ((0, 0), (0, Bp - B)))
        beffT = jnp.asarray(t, _F32) * w1tT + b1T       # fold t into one tiny bias
        outT = _call(_cnf_kernel_t, xTp,
                     pl.BlockSpec((D, TB), lambda i: (0, i)), TB, Bp, beffT)
        if Bp != B:
            outT = outT[:, :B]
        if propagate_x:
            outT = outT + 0.0 * xT.astype(_F32)         # exact NaN/Inf propagation
        return outT

    @jax.jit
    def cnf(t, x):
        """Natural (B, D) interface matching the PyTorch module."""
        B = x.shape[0]
        assert x.shape[1] == D
        TB = _pick_lane_tile(B, tile_b_nat)
        Bp = _round_up(B, TB)
        xp = x.astype(_F32)
        if Bp != B:
            xp = jnp.pad(xp, ((0, Bp - B), (0, 0)))
        beffT = jnp.asarray(t, _F32) * w1tT + b1T
        outT = _call(_cnf_kernel_nat, xp,
                     pl.BlockSpec((TB, D), lambda i: (i, 0)), TB, Bp, beffT)
        out = outT[:, :B].T                              # single wrapper transpose
        if propagate_x:
            out = out + 0.0 * x.astype(_F32)
        return out

    return cnf, cnf_t


def _reference(t, x, W1, b1, W2, b2):
    """Pure-JAX reference matching the PyTorch module (autograd trace via jacfwd)."""
    B, _ = x.shape
    x_in = x[:, 1:]
    inp = jnp.concatenate([x_in, jnp.full((B, 1), t, x.dtype)], axis=-1)
    x_out = jnp.tanh(inp @ W1 + b1) @ W2 + b2

    def per_sample(xi):
        f = lambda xin: jnp.tanh(
            jnp.concatenate([xin, jnp.array([t], x.dtype)]) @ W1 + b1) @ W2 + b2
        return jnp.trace(jax.jacfwd(f)(xi))

    trJ = jax.vmap(per_sample)(x_in)
    return jnp.concatenate([-trJ[:, None], x_out], axis=1) + 0.0 * x


if __name__ == "__main__":
    B, d, H = 8, 7, 32          # x is (B, 1+d) = (8, 8)
    D = d + 1
    t = 0.5

    key = jax.random.PRNGKey(0)
    kx, k1, k2, k3, k4 = jax.random.split(key, 5)
    x = jax.random.normal(kx, (B, D), jnp.float32)
    W1 = jax.random.normal(k1, (D, H), jnp.float32) * 0.3     # net: (d+1) -> H
    b1 = jax.random.normal(k2, (H,), jnp.float32) * 0.1
    W2 = jax.random.normal(k3, (H, d), jnp.float32) * 0.3     # net: H -> d
    b2 = jax.random.normal(k4, (d,), jnp.float32) * 0.1

    cnf, cnf_t = make_cnf(W1, b1, W2, b2)

    out = jax.block_until_ready(cnf(t, x))                    # (B, D) interface
    outT = jax.block_until_ready(cnf_t(t, x.T))               # transposed-state path

    with jax.default_matmul_precision("float32"):
        ref = jax.block_until_ready(_reference(t, x, W1, b1, W2, b2))

    assert out.shape == (B, D) and out.dtype == jnp.float32
    assert outT.shape == (D, B)
    assert jnp.allclose(out, ref, atol=1e-4, rtol=1e-4), (out, ref)
    assert jnp.allclose(outT.T, ref, atol=1e-4, rtol=1e-4), (outT.T, ref)
    print("KERNEL_OK")
</pallas_src>

<mosaic_0001>
module attributes {stable_mosaic.version = 11 : i64} {
  func.func @_cnf_kernel_nat(%arg0: i32, %arg1: memref<128x8xf32, #tpu.memory_space<vmem>>, %arg2: memref<32x8xf32, #tpu.memory_space<vmem>>, %arg3: memref<32x1xf32, #tpu.memory_space<vmem>>, %arg4: memref<8x32xf32, #tpu.memory_space<vmem>>, %arg5: memref<8x1xf32, #tpu.memory_space<vmem>>, %arg6: memref<1x32xf32, #tpu.memory_space<vmem>>, %arg7: memref<8x128xf32, #tpu.memory_space<vmem>>) attributes {dimension_semantics = [#tpu.dimension_semantics<parallel>], iteration_bounds = array<i64: 1>, scalar_prefetch = 0 : i64, scratch_operands = 0 : i64, tpu.core_type = #tpu.core_type<tc>, window_params = [{transform_indices = @transform_0, window_bounds = array<i64: 128, 8>}, {pipeline_mode = #tpu.pipeline_mode<synchronous>, transform_indices = @transform_1, window_bounds = array<i64: 32, 8>}, {pipeline_mode = #tpu.pipeline_mode<synchronous>, transform_indices = @transform_2, window_bounds = array<i64: 32, 1>}, {pipeline_mode = #tpu.pipeline_mode<synchronous>, transform_indices = @transform_3, window_bounds = array<i64: 8, 32>}, {pipeline_mode = #tpu.pipeline_mode<synchronous>, transform_indices = @transform_4, window_bounds = array<i64: 8, 1>}, {pipeline_mode = #tpu.pipeline_mode<synchronous>, transform_indices = @transform_5, window_bounds = array<i64: 1, 32>}, {transform_indices = @transform_6, window_bounds = array<i64: 8, 128>}]} {
    %c0 = arith.constant 0 : index
    %c0_0 = arith.constant 0 : index
    %0 = vector.load %arg2[%c0, %c0_0] : memref<32x8xf32, #tpu.memory_space<vmem>>, vector<32x8xf32>
    %c0_1 = arith.constant 0 : index
    %c0_2 = arith.constant 0 : index
    %1 = vector.load %arg1[%c0_1, %c0_2] : memref<128x8xf32, #tpu.memory_space<vmem>>, vector<128x8xf32>
    %cst = arith.constant dense<0.000000e+00> : vector<32x128xf32>
    %2 = tpu.matmul %0, %1, %cst {dimension_numbers = #tpu.dot_dimension_numbers<[1], [1], [0], [0], [0, 0, 1, 0], [], []>, precision = #tpu.contract_precision<fp32>} : vector<32x8xf32>, vector<128x8xf32>, vector<32x128xf32> -> vector<32x128xf32>
    %c0_3 = arith.constant 0 : index
    %c0_4 = arith.constant 0 : index
    %3 = vector.load %arg3[%c0_3, %c0_4] : memref<32x1xf32, #tpu.memory_space<vmem>>, vector<32x1xf32>
    %4 = vector.broadcast %3 : vector<32x1xf32> to vector<32x128xf32>
    %5 = arith.addf %2, %4 : vector<32x128xf32>
    %6 = math.tanh %5 : vector<32x128xf32>
    %c0_5 = arith.constant 0 : index
    %c0_6 = arith.constant 0 : index
    %7 = vector.load %arg4[%c0_5, %c0_6] : memref<8x32xf32, #tpu.memory_space<vmem>>, vector<8x32xf32>
    %cst_7 = arith.constant dense<0.000000e+00> : vector<8x128xf32>
    %8 = tpu.matmul %7, %6, %cst_7 {dimension_numbers = #tpu.dot_dimension_numbers<[1], [0], [0], [1], [0, 0, 1, 1], [], []>, precision = #tpu.contract_precision<fp32>} : vector<8x32xf32>, vector<32x128xf32>, vector<8x128xf32> -> vector<8x128xf32>
    %c0_8 = arith.constant 0 : index
    %c0_9 = arith.constant 0 : index
    %9 = vector.load %arg5[%c0_8, %c0_9] : memref<8x1xf32, #tpu.memory_space<vmem>>, vector<8x1xf32>
    %10 = vector.broadcast %9 : vector<8x1xf32> to vector<8x128xf32>
    %11 = arith.addf %8, %10 : vector<8x128xf32>
    %c0_10 = arith.constant 0 : index
    %c0_11 = arith.constant 0 : index
    %12 = vector.load %arg6[%c0_10, %c0_11] : memref<1x32xf32, #tpu.memory_space<vmem>>, vector<1x32xf32>
    %13 = arith.mulf %6, %6 : vector<32x128xf32>
    %cst_12 = arith.constant 1.000000e+00 : f32
    %14 = vector.broadcast %cst_12 : f32 to vector<32x128xf32>
    %15 = arith.subf %14, %13 : vector<32x128xf32>
    %cst_13 = arith.constant dense<0.000000e+00> : vector<1x128xf32>
    %16 = tpu.matmul %12, %15, %cst_13 {dimension_numbers = #tpu.dot_dimension_numbers<[1], [0], [0], [1], [0, 0, 1, 1], [], []>, precision = #tpu.contract_precision<fp32>} : vector<1x32xf32>, vector<32x128xf32>, vector<1x128xf32> -> vector<1x128xf32>
    %c0_14 = arith.constant 0 : index
    %c0_15 = arith.constant 0 : index
    %17 = vector.load %arg7[%c0_14, %c0_15] : memref<8x128xf32, #tpu.memory_space<vmem>>, vector<8x128xf32>
    tpu.vector_store %arg7[%c0_14, %c0_15], %11 {strides = array<i32>} : memref<8x128xf32, #tpu.memory_space<vmem>>, vector<8x128xf32>,
    %cst_16 = arith.constant 0.000000e+00 : f32
    %18 = vector.broadcast %cst_16 : f32 to vector<1x128xf32>
    %19 = arith.subf %18, %16 : vector<1x128xf32>
    %c0_17 = arith.constant 0 : index
    %c0_18 = arith.constant 0 : index
    %20 = vector.load %arg7[%c0_17, %c0_18] : memref<8x128xf32, #tpu.memory_space<vmem>>, vector<1x128xf32>
    tpu.vector_store %arg7[%c0_17, %c0_18], %19 {strides = array<i32>} : memref<8x128xf32, #tpu.memory_space<vmem>>, vector<1x128xf32>,
    return
  }
  func.func @transform_0(%arg0: i32) -> (i32, i32) {
    %c0_i32 = arith.constant 0 : i32
    %c0_i32_0 = arith.constant 0 : i32
    return %arg0, %c0_i32 : i32, i32
  }
  func.func @transform_1(%arg0: i32) -> (i32, i32) {
    %c0_i32 = arith.constant 0 : i32
    %c0_i32_0 = arith.constant 0 : i32
    %c0_i32_1 = arith.constant 0 : i32
    return %c0_i32, %c0_i32_0 : i32, i32
  }
  func.func @transform_2(%arg0: i32) -> (i32, i32) {
    %c0_i32 = arith.constant 0 : i32
    %c0_i32_0 = arith.constant 0 : i32
    %c0_i32_1 = arith.constant 0 : i32
    return %c0_i32, %c0_i32_0 : i32, i32
  }
  func.func @transform_3(%arg0: i32) -> (i32, i32) {
    %c0_i32 = arith.constant 0 : i32
    %c0_i32_0 = arith.constant 0 : i32
    %c0_i32_1 = arith.constant 0 : i32
    return %c0_i32, %c0_i32_0 : i32, i32
  }
  func.func @transform_4(%arg0: i32) -> (i32, i32) {
    %c0_i32 = arith.constant 0 : i32
    %c0_i32_0 = arith.constant 0 : i32
    %c0_i32_1 = arith.constant 0 : i32
    return %c0_i32, %c0_i32_0 : i32, i32
  }
  func.func @transform_5(%arg0: i32) -> (i32, i32) {
    %c0_i32 = arith.constant 0 : i32
    %c0_i32_0 = arith.constant 0 : i32
    %c0_i32_1 = arith.constant 0 : i32
    return %c0_i32, %c0_i32_0 : i32, i32
  }
  func.func @transform_6(%arg0: i32) -> (i32, i32) {
    %c0_i32 = arith.constant 0 : i32
    %c0_i32_0 = arith.constant 0 : i32
    return %c0_i32, %arg0 : i32, i32
  }
}

</mosaic_0001>

<llo_original>
// kernel: cnf.1
$region0: #{cnf.1}
  #allocation0 [shape = 'u32[]', space=smem, size = 0x4, offset = 0x4, fixed_abs, tag = 'smem constant byte address 0x4 - core index']
  #allocation1 [shape = 'u32[144,128]{1,0:T(1,128)}', space=vmem, size = 0x12000, scoped, tag = 'internal scratch']
  %s0 = inlined_call_operand.vmem [shape: f32[128,8], index: 0, kind: input, shape index: {}]
  %s1 = inlined_call_operand.vmem [shape: f32[32,8], index: 1, kind: input, shape index: {}]
  %s2 = inlined_call_operand.vmem [shape: f32[32,1], index: 2, kind: input, shape index: {}]
  %s3 = inlined_call_operand.vmem [shape: f32[8,32], index: 3, kind: input, shape index: {}]
  %s4 = inlined_call_operand.vmem [shape: f32[8,1], index: 4, kind: input, shape index: {}]
  %s5 = inlined_call_operand.vmem [shape: f32[1,32], index: 5, kind: input, shape index: {}]
  %s6 = inlined_call_operand.vmem [shape: f32[8,128], index: 6, kind: output, shape index: {}]
  %s7 = sld [smem:[#allocation0]]
  $region34: #{cnf.1} parent=0
    _
  %s9 = ssub.s32 1, %s7
  %s10 = scalar_select 0, %s9, %s7
  // Predicated region
  $region2: #{cnf.1} parent=0 // pred_check
    _
  $region3: #{cnf.1} parent=0 // pred_check_branch
    %12 = sbr.rel (0) target = $region5
  $region4: #{cnf.1} parent=0 // pred_region
    _
  $region5: #{cnf.1} parent=0 // pred_fallthru
    _
  // Predicated region
  $region6: #{cnf.1} parent=0 // pred_check
    _
  $region7: #{cnf.1} parent=0 // pred_check_branch
    %14 = sbr.rel (0) target = $region9
  $region8: #{cnf.1} parent=0 // pred_region
    _
  $region9: #{cnf.1} parent=0 // pred_fallthru
    _
  // Predicated region
  $region10: #{cnf.1} parent=0 // pred_check
    _
  $region11: #{cnf.1} parent=0 // pred_check_branch
    %16 = sbr.rel (0) target = $region13
  $region12: #{cnf.1} parent=0 // pred_region
    _
  $region13: #{cnf.1} parent=0 // pred_fallthru
    _
  // Predicated region
  $region14: #{cnf.1} parent=0 // pred_check
    _
  $region15: #{cnf.1} parent=0 // pred_check_branch
    %18 = sbr.rel (0) target = $region17
  $region16: #{cnf.1} parent=0 // pred_region
    _
  $region17: #{cnf.1} parent=0 // pred_fallthru
    _
  // Predicated region
  $region18: #{cnf.1} parent=0 // pred_check
    _
  $region19: #{cnf.1} parent=0 // pred_check_branch
    %20 = sbr.rel (0) target = $region21
  $region20: #{cnf.1} parent=0 // pred_region
    _
  $region21: #{cnf.1} parent=0 // pred_fallthru
    _
  // Predicated region
  $region22: #{cnf.1} parent=0 // pred_check
    _
  $region23: #{cnf.1} parent=0 // pred_check_branch
    %22 = sbr.rel (0) target = $region25
  $region24: #{cnf.1} parent=0 // pred_region
    _
  $region25: #{cnf.1} parent=0 // pred_fallthru
    _
  %v23 = vld [vmem:[%s1] sm:$0xff]
  %v24 = vld [vmem:[%s1 + $0x8] sm:$0xff]
  %v25 = vld [vmem:[%s1 + $0x10] sm:$0xff]
  %v26 = vld [vmem:[%s1 + $0x18] sm:$0xff]
  %v27 = vld [vmem:[%s0] sm:$0xff]
  %v28 = vld [vmem:[%s0 + $0x8] sm:$0xff]
  %v29 = vld [vmem:[%s0 + $0x10] sm:$0xff]
  %v30 = vld [vmem:[%s0 + $0x18] sm:$0xff]
  %v31 = vld [vmem:[%s0 + $0x20] sm:$0xff]
  %v32 = vld [vmem:[%s0 + $0x28] sm:$0xff]
  %v33 = vld [vmem:[%s0 + $0x30] sm:$0xff]
  %v34 = vld [vmem:[%s0 + $0x38] sm:$0xff]
  %v35 = vld [vmem:[%s0 + $0x40] sm:$0xff]
  %v36 = vld [vmem:[%s0 + $0x48] sm:$0xff]
  %v37 = vld [vmem:[%s0 + $0x50] sm:$0xff]
  %v38 = vld [vmem:[%s0 + $0x58] sm:$0xff]
  %v39 = vld [vmem:[%s0 + $0x60] sm:$0xff]
  %v40 = vld [vmem:[%s0 + $0x68] sm:$0xff]
  %v41 = vld [vmem:[%s0 + $0x70] sm:$0xff]
  %v42 = vld [vmem:[%s0 + $0x78] sm:$0xff]
  %v43 = vld [vmem:[%s2] sm:$0xff]
  %v44 = vld [vmem:[%s2 + $0x8] sm:$0xff]
  %v45 = vld [vmem:[%s2 + $0x10] sm:$0xff]
  %v46 = vld [vmem:[%s2 + $0x18] sm:$0xff]
  %48 = vset.pattern.permute.xlu0 0
  %49 = vperm.xlu0 %48, %v43
  %v50 = vpop.permute.xlu0 %49
  %53 = vset.pattern.permute.xlu0 0
  %54 = vperm.xlu0 %53, %v44
  %v55 = vpop.permute.xlu0 %54
  %58 = vset.pattern.permute.xlu0 0
  %59 = vperm.xlu0 %58, %v45
  %v60 = vpop.permute.xlu0 %59
  %63 = vset.pattern.permute.xlu0 0
  %64 = vperm.xlu0 %63, %v46
  %v65 = vpop.permute.xlu0 %64
  %vm67 = vcmask 64512
  %v69 = vsel %vm67, %v23, 0
  %v72 = vsel %vm67, %v24, 0
  %v75 = vsel %vm67, %v25, 0
  %v78 = vsel %vm67, %v26, 0
  %v81 = vsel %vm67, %v27, 0
  %v84 = vsel %vm67, %v28, 0
  %v87 = vsel %vm67, %v29, 0
  %v90 = vsel %vm67, %v30, 0
  %v93 = vsel %vm67, %v31, 0
  %v96 = vsel %vm67, %v32, 0
  %v99 = vsel %vm67, %v33, 0
  %v102 = vsel %vm67, %v34, 0
  %v105 = vsel %vm67, %v35, 0
  %v108 = vsel %vm67, %v36, 0
  %v111 = vsel %vm67, %v37, 0
  %v114 = vsel %vm67, %v38, 0
  %v117 = vsel %vm67, %v39, 0
  %v120 = vsel %vm67, %v40, 0
  %v123 = vsel %vm67, %v41, 0
  %v126 = vsel %vm67, %v42, 0
  %128 = vmatprep.subr.mxu0 0.0
  %v129 = vand.u32 %v81, 4294901760
  %130 = vmatpush1.xpose.msra.mxu0 %v129
  %131 = vmatprep.subr.mxu0 0.0
  %v132 = vand.u32 %v84, 4294901760
  %133 = vmatpush1.xpose.msra.mxu0 %v132
  %134 = vmatprep.subr.mxu0 0.0
  %v135 = vand.u32 %v87, 4294901760
  %136 = vmatpush1.xpose.msra.mxu0 %v135
  %137 = vmatprep.subr.mxu0 0.0
  %v138 = vand.u32 %v90, 4294901760
  %139 = vmatpush1.xpose.msra.mxu0 %v138
  %140 = vmatprep.subr.mxu0 0.0
  %v141 = vand.u32 %v93, 4294901760
  %142 = vmatpush1.xpose.msra.mxu0 %v141
  %143 = vmatprep.subr.mxu0 0.0
  %v144 = vand.u32 %v96, 4294901760
  %145 = vmatpush1.xpose.msra.mxu0 %v144
  %146 = vmatprep.subr.mxu0 0.0
  %v147 = vand.u32 %v99, 4294901760
  %148 = vmatpush1.xpose.msra.mxu0 %v147
  %149 = vmatprep.subr.mxu0 0.0
  %v150 = vand.u32 %v102, 4294901760
  %151 = vmatpush1.xpose.msra.mxu0 %v150
  %152 = vmatprep.subr.mxu0 0.0
  %v153 = vand.u32 %v105, 4294901760
  %154 = vmatpush1.xpose.msra.mxu0 %v153
  %155 = vmatprep.subr.mxu0 0.0
  %v156 = vand.u32 %v108, 4294901760
  %157 = vmatpush1.xpose.msra.mxu0 %v156
  %158 = vmatprep.subr.mxu0 0.0
  %v159 = vand.u32 %v111, 4294901760
  %160 = vmatpush1.xpose.msra.mxu0 %v159
  %161 = vmatprep.subr.mxu0 0.0
  %v162 = vand.u32 %v114, 4294901760
  %163 = vmatpush1.xpose.msra.mxu0 %v162
  %164 = vmatprep.subr.mxu0 0.0
  %v165 = vand.u32 %v117, 4294901760
  %166 = vmatpush1.xpose.msra.mxu0 %v165
  %167 = vmatprep.subr.mxu0 0.0
  %v168 = vand.u32 %v120, 4294901760
  %169 = vmatpush1.xpose.msra.mxu0 %v168
  %170 = vmatprep.subr.mxu0 0.0
  %v171 = vand.u32 %v123, 4294901760
  %172 = vmatpush1.xpose.msra.mxu0 %v171
  %173 = vmatprep.subr.mxu0 0.0
  %v174 = vand.u32 %v126, 4294901760
  %175 = vmatpush1.xpose.msra.mxu0 %v174
  %176 = vmatprep.subr.mxu0 0.0
  %177 = vmatpush1.xpose.msra.mxu0 0.0
  %178 = vmatprep.subr.mxu0 0.0
  %179 = vmatpush1.xpose.msra.mxu0 0.0
  %180 = vmatprep.subr.mxu0 0.0
  %181 = vmatpush1.xpose.msra.mxu0 0.0
  %182 = vmatprep.subr.mxu0 0.0
  %183 = vmatpush1.xpose.msra.mxu0 0.0
  %184 = vmatprep.subr.mxu0 0.0
  %185 = vmatpush1.xpose.msra.mxu0 0.0
  %186 = vmatprep.subr.mxu0 0.0
  %187 = vmatpush1.xpose.msra.mxu0 0.0
  %188 = vmatprep.subr.mxu0 0.0
  %189 = vmatpush1.xpose.msra.mxu0 0.0
  %190 = vmatprep.subr.mxu0 0.0
  %191 = vmatpush1.xpose.msra.mxu0 0.0
  %192 = vmatprep.subr.mxu0 0.0
  %193 = vmatpush1.xpose.msra.mxu0 0.0
  %194 = vmatprep.subr.mxu0 0.0
  %195 = vmatpush1.xpose.msra.mxu0 0.0
  %196 = vmatprep.subr.mxu0 0.0
  %197 = vmatpush1.xpose.msra.mxu0 0.0
  %198 = vmatprep.subr.mxu0 0.0
  %199 = vmatpush1.xpose.msra.mxu0 0.0
  %200 = vmatprep.subr.mxu0 0.0
  %201 = vmatpush1.xpose.msra.mxu0 0.0
  %202 = vmatprep.subr.mxu0 0.0
  %203 = vmatpush1.xpose.msra.mxu0 0.0
  %204 = vmatprep.subr.mxu0 0.0
  %205 = vmatpush1.xpose.msra.mxu0 0.0
  %206 = vmatprep.subr.mxu0 0.0
  %207 = vmatpush1.xpose.msra.mxu0 0.0
  %208 = vmatprep.mubr.f32.mxu0 0.0
  %v209 = vand.u32 %v69, 4294901760
  %v210 = vsub.f32 %v69, %v209
  %v211 = vand.u32 %v210, 4294901760
  %v212 = vsub.f32 %v210, %v211
  %v213 = vand.u32 %v212, 4294901760
  %214 = vmatmul.mubr.f32.gmra.mrb[0].mxu0 %v213
  %v215 = vpop.f32.mrb[0].mxu0
  %v216 = vadd.f32 %v50, %v215
  %v217 = vpop.f32.mrb[0].mxu0
  %218 = vmatprep.mubr.f32.mxu0 0.0
  %v219 = vand.u32 %v72, 4294901760
  %v220 = vsub.f32 %v72, %v219
  %v221 = vand.u32 %v220, 4294901760
  %v222 = vsub.f32 %v220, %v221
  %v223 = vand.u32 %v222, 4294901760
  %224 = vmatmul.mubr.f32.gmra.mrb[0].mxu0 %v223
  %v225 = vpop.f32.mrb[0].mxu0
  %v226 = vadd.f32 %v55, %v225
  %v227 = vpop.f32.mrb[0].mxu0
  %228 = vmatprep.mubr.f32.mxu0 0.0
  %v229 = vand.u32 %v75, 4294901760
  %v230 = vsub.f32 %v75, %v229
  %v231 = vand.u32 %v230, 4294901760
  %v232 = vsub.f32 %v230, %v231
  %v233 = vand.u32 %v232, 4294901760
  %234 = vmatmul.mubr.f32.gmra.mrb[0].mxu0 %v233
  %v235 = vpop.f32.mrb[0].mxu0
  %v236 = vadd.f32 %v60, %v235
  %v237 = vpop.f32.mrb[0].mxu0
  %238 = vmatprep.mubr.f32.mxu0 0.0
  %v239 = vand.u32 %v78, 4294901760
  %v240 = vsub.f32 %v78, %v239
  %v241 = vand.u32 %v240, 4294901760
  %v242 = vsub.f32 %v240, %v241
  %v243 = vand.u32 %v242, 4294901760
  %244 = vmatmul.mubr.f32.gmra.mrb[0].mxu0 %v243
  %v245 = vpop.f32.mrb[0].mxu0
  %v246 = vadd.f32 %v65, %v245
  %v247 = vpop.f32.mrb[0].mxu0
  %248 = vdwg.mxu0
  %249 = vmatprep.subr.mxu0 0.0
  %v250 = vand.u32 %v81, 4294901760
  %v251 = vsub.f32 %v81, %v250
  %v252 = vand.u32 %v251, 4294901760
  %v253 = vsub.f32 %v251, %v252
  %v254 = vand.u32 %v253, 4294901760
  %255 = vmatpush1.xpose.msra.mxu0 %v254
  %256 = vmatprep.subr.mxu0 0.0
  %v257 = vand.u32 %v84, 4294901760
  %v258 = vsub.f32 %v84, %v257
  %v259 = vand.u32 %v258, 4294901760
  %v260 = vsub.f32 %v258, %v259
  %v261 = vand.u32 %v260, 4294901760
  %262 = vmatpush1.xpose.msra.mxu0 %v261
  %263 = vmatprep.subr.mxu0 0.0
  %v264 = vand.u32 %v87, 4294901760
  %v265 = vsub.f32 %v87, %v264
  %v266 = vand.u32 %v265, 4294901760
  %v267 = vsub.f32 %v265, %v266
  %v268 = vand.u32 %v267, 4294901760
  %269 = vmatpush1.xpose.msra.mxu0 %v268
  %270 = vmatprep.subr.mxu0 0.0
  %v271 = vand.u32 %v90, 4294901760
  %v272 = vsub.f32 %v90, %v271
  %v273 = vand.u32 %v272, 4294901760
  %v274 = vsub.f32 %v272, %v273
  %v275 = vand.u32 %v274, 4294901760
  %276 = vmatpush1.xpose.msra.mxu0 %v275
  %277 = vmatprep.subr.mxu0 0.0
  %v278 = vand.u32 %v93, 4294901760
  %v279 = vsub.f32 %v93, %v278
  %v280 = vand.u32 %v279, 4294901760
  %v281 = vsub.f32 %v279, %v280
  %v282 = vand.u32 %v281, 4294901760
  %283 = vmatpush1.xpose.msra.mxu0 %v282
  %284 = vmatprep.subr.mxu0 0.0
  %v285 = vand.u32 %v96, 4294901760
  %v286 = vsub.f32 %v96, %v285
  %v287 = vand.u32 %v286, 4294901760
  %v288 = vsub.f32 %v286, %v287
  %v289 = vand.u32 %v288, 4294901760
  %290 = vmatpush1.xpose.msra.mxu0 %v289
  %291 = vmatprep.subr.mxu0 0.0
  %v292 = vand.u32 %v99, 4294901760
  %v293 = vsub.f32 %v99, %v292
  %v294 = vand.u32 %v293, 4294901760
  %v295 = vsub.f32 %v293, %v294
  %v296 = vand.u32 %v295, 4294901760
  %297 = vmatpush1.xpose.msra.mxu0 %v296
  %298 = vmatprep.subr.mxu0 0.0
  %v299 = vand.u32 %v102, 4294901760
  %v300 = vsub.f32 %v102, %v299
  %v301 = vand.u32 %v300, 4294901760
  %v302 = vsub.f32 %v300, %v301
  %v303 = vand.u32 %v302, 4294901760
  %304 = vmatpush1.xpose.msra.mxu0 %v303
  %305 = vmatprep.subr.mxu0 0.0
  %v306 = vand.u32 %v105, 4294901760
  %v307 = vsub.f32 %v105, %v306
  %v308 = vand.u32 %v307, 4294901760
  %v309 = vsub.f32 %v307, %v308
  %v310 = vand.u32 %v309, 4294901760
  %311 = vmatpush1.xpose.msra.mxu0 %v310
  %312 = vmatprep.subr.mxu0 0.0
  %v313 = vand.u32 %v108, 4294901760
  %v314 = vsub.f32 %v108, %v313
  %v315 = vand.u32 %v314, 4294901760
  %v316 = vsub.f32 %v314, %v315
  %v317 = vand.u32 %v316, 4294901760
  %318 = vmatpush1.xpose.msra.mxu0 %v317
  %319 = vmatprep.subr.mxu0 0.0
  %v320 = vand.u32 %v111, 4294901760
  %v321 = vsub.f32 %v111, %v320
  %v322 = vand.u32 %v321, 4294901760
  %v323 = vsub.f32 %v321, %v322
  %v324 = vand.u32 %v323, 4294901760
  %325 = vmatpush1.xpose.msra.mxu0 %v324
  %326 = vmatprep.subr.mxu0 0.0
  %v327 = vand.u32 %v114, 4294901760
  %v328 = vsub.f32 %v114, %v327
  %v329 = vand.u32 %v328, 4294901760
  %v330 = vsub.f32 %v328, %v329
  %v331 = vand.u32 %v330, 4294901760
  %332 = vmatpush1.xpose.msra.mxu0 %v331
  %333 = vmatprep.subr.mxu0 0.0
  %v334 = vand.u32 %v117, 4294901760
  %v335 = vsub.f32 %v117, %v334
  %v336 = vand.u32 %v335, 4294901760
  %v337 = vsub.f32 %v335, %v336
  %v338 = vand.u32 %v337, 4294901760
  %339 = vmatpush1.xpose.msra.mxu0 %v338
  %340 = vmatprep.subr.mxu0 0.0
  %v341 = vand.u32 %v120, 4294901760
  %v342 = vsub.f32 %v120, %v341
  %v343 = vand.u32 %v342, 4294901760
  %v344 = vsub.f32 %v342, %v343
  %v345 = vand.u32 %v344, 4294901760
  %346 = vmatpush1.xpose.msra.mxu0 %v345
  %347 = vmatprep.subr.mxu0 0.0
  %v348 = vand.u32 %v123, 4294901760
  %v349 = vsub.f32 %v123, %v348
  %v350 = vand.u32 %v349, 4294901760
  %v351 = vsub.f32 %v349, %v350
  %v352 = vand.u32 %v351, 4294901760
  %353 = vmatpush1.xpose.msra.mxu0 %v352
  %354 = vmatprep.subr.mxu0 0.0
  %v355 = vand.u32 %v126, 4294901760
  %v356 = vsub.f32 %v126, %v355
  %v357 = vand.u32 %v356, 4294901760
  %v358 = vsub.f32 %v356, %v357
  %v359 = vand.u32 %v358, 4294901760
  %360 = vmatpush1.xpose.msra.mxu0 %v359
  %361 = vmatprep.subr.mxu0 0.0
  %362 = vmatpush1.xpose.msra.mxu0 0.0
  %363 = vmatprep.subr.mxu0 0.0
  %364 = vmatpush1.xpose.msra.mxu0 0.0
  %365 = vmatprep.subr.mxu0 0.0
  %366 = vmatpush1.xpose.msra.mxu0 0.0
  %367 = vmatprep.subr.mxu0 0.0
  %368 = vmatpush1.xpose.msra.mxu0 0.0
  %369 = vmatprep.subr.mxu0 0.0
  %370 = vmatpush1.xpose.msra.mxu0 0.0
  %371 = vmatprep.subr.mxu0 0.0
  %372 = vmatpush1.xpose.msra.mxu0 0.0
  %373 = vmatprep.subr.mxu0 0.0
  %374 = vmatpush1.xpose.msra.mxu0 0.0
  %375 = vmatprep.subr.mxu0 0.0
  %376 = vmatpush1.xpose.msra.mxu0 0.0
  %377 = vmatprep.subr.mxu0 0.0
  %378 = vmatpush1.xpose.msra.mxu0 0.0
  %379 = vmatprep.subr.mxu0 0.0
  %380 = vmatpush1.xpose.msra.mxu0 0.0
  %381 = vmatprep.subr.mxu0 0.0
  %382 = vmatpush1.xpose.msra.mxu0 0.0
  %383 = vmatprep.subr.mxu0 0.0
  %384 = vmatpush1.xpose.msra.mxu0 0.0
  %385 = vmatprep.subr.mxu0 0.0
  %386 = vmatpush1.xpose.msra.mxu0 0.0
  %387 = vmatprep.subr.mxu0 0.0
  %388 = vmatpush1.xpose.msra.mxu0 0.0
  %389 = vmatprep.subr.mxu0 0.0
  %390 = vmatpush1.xpose.msra.mxu0 0.0
  %391 = vmatprep.subr.mxu0 0.0
  %392 = vmatpush1.xpose.msra.mxu0 0.0
  %393 = vmatprep.mubr.f32.mxu0 0.0
  %v394 = vand.u32 %v69, 4294901760
  %395 = vmatmul.mubr.f32.gmra.mrb[0].mxu0 %v394
  %v396 = vpop.f32.mrb[0].mxu0
  %v397 = vadd.f32 %v216, %v396
  %v398 = vpop.f32.mrb[0].mxu0
  %399 = vmatprep.mubr.f32.mxu0 0.0
  %v400 = vand.u32 %v72, 4294901760
  %401 = vmatmul.mubr.f32.gmra.mrb[0].mxu0 %v400
  %v402 = vpop.f32.mrb[0].mxu0
  %v403 = vadd.f32 %v226, %v402
  %v404 = vpop.f32.mrb[0].mxu0
  %405 = vmatprep.mubr.f32.mxu0 0.0
  %v406 = vand.u32 %v75, 4294901760
  %407 = vmatmul.mubr.f32.gmra.mrb[0].mxu0 %v406
  %v408 = vpop.f32.mrb[0].mxu0
  %v409 = vadd.f32 %v236, %v408
  %v410 = vpop.f32.mrb[0].mxu0
  %411 = vmatprep.mubr.f32.mxu0 0.0
  %v412 = vand.u32 %v78, 4294901760
  %413 = vmatmul.mubr.f32.gmra.mrb[0].mxu0 %v412
  %v414 = vpop.f32.mrb[0].mxu0
  %v415 = vadd.f32 %v246, %v414
  %v416 = vpop.f32.mrb[0].mxu0
  %417 = vdwg.mxu0
  %418 = vmatprep.subr.mxu0 0.0
  %v419 = vand.u32 %v81, 4294901760
  %v420 = vsub.f32 %v81, %v419
  %421 = vmatpush1.xpose.msra.mxu0 %v420
  %422 = vmatprep.subr.mxu0 0.0
  %v423 = vand.u32 %v84, 4294901760
  %v424 = vsub.f32 %v84, %v423
  %425 = vmatpush1.xpose.msra.mxu0 %v424
  %426 = vmatprep.subr.mxu0 0.0
  %v427 = vand.u32 %v87, 4294901760
  %v428 = vsub.f32 %v87, %v427
  %429 = vmatpush1.xpose.msra.mxu0 %v428
  %430 = vmatprep.subr.mxu0 0.0
  %v431 = vand.u32 %v90, 4294901760
  %v432 = vsub.f32 %v90, %v431
  %433 = vmatpush1.xpose.msra.mxu0 %v432
  %434 = vmatprep.subr.mxu0 0.0
  %v435 = vand.u32 %v93, 4294901760
  %v436 = vsub.f32 %v93, %v435
  %437 = vmatpush1.xpose.msra.mxu0 %v436
  %438 = vmatprep.subr.mxu0 0.0
  %v439 = vand.u32 %v96, 4294901760
  %v440 = vsub.f32 %v96, %v439
  %441 = vmatpush1.xpose.msra.mxu0 %v440
  %442 = vmatprep.subr.mxu0 0.0
  %v443 = vand.u32 %v99, 4294901760
  %v444 = vsub.f32 %v99, %v443
  %445 = vmatpush1.xpose.msra.mxu0 %v444
  %446 = vmatprep.subr.mxu0 0.0
  %v447 = vand.u32 %v102, 4294901760
  %v448 = vsub.f32 %v102, %v447
  %449 = vmatpush1.xpose.msra.mxu0 %v448
  %450 = vmatprep.subr.mxu0 0.0
  %v451 = vand.u32 %v105, 4294901760
  %v452 = vsub.f32 %v105, %v451
  %453 = vmatpush1.xpose.msra.mxu0 %v452
  %454 = vmatprep.subr.mxu0 0.0
  %v455 = vand.u32 %v108, 4294901760
  %v456 = vsub.f32 %v108, %v455
  %457 = vmatpush1.xpose.msra.mxu0 %v456
  %458 = vmatprep.subr.mxu0 0.0
  %v459 = vand.u32 %v111, 4294901760
  %v460 = vsub.f32 %v111, %v459
  %461 = vmatpush1.xpose.msra.mxu0 %v460
  %462 = vmatprep.subr.mxu0 0.0
  %v463 = vand.u32 %v114, 4294901760
  %v464 = vsub.f32 %v114, %v463
  %465 = vmatpush1.xpose.msra.mxu0 %v464
  %466 = vmatprep.subr.mxu0 0.0
  %v467 = vand.u32 %v117, 4294901760
  %v468 = vsub.f32 %v117, %v467
  %469 = vmatpush1.xpose.msra.mxu0 %v468
  %470 = vmatprep.subr.mxu0 0.0
  %v471 = vand.u32 %v120, 4294901760
  %v472 = vsub.f32 %v120, %v471
  %473 = vmatpush1.xpose.msra.mxu0 %v472
  %474 = vmatprep.subr.mxu0 0.0
  %v475 = vand.u32 %v123, 4294901760
  %v476 = vsub.f32 %v123, %v475
  %477 = vmatpush1.xpose.msra.mxu0 %v476
  %478 = vmatprep.subr.mxu0 0.0
  %v479 = vand.u32 %v126, 4294901760
  %v480 = vsub.f32 %v126, %v479
  %481 = vmatpush1.xpose.msra.mxu0 %v480
  %482 = vmatprep.subr.mxu0 0.0
  %483 = vmatpush1.xpose.msra.mxu0 0.0
  %484 = vmatprep.subr.mxu0 0.0
  %485 = vmatpush1.xpose.msra.mxu0 0.0
  %486 = vmatprep.subr.mxu0 0.0
  %487 = vmatpush1.xpose.msra.mxu0 0.0
  %488 = vmatprep.subr.mxu0 0.0
  %489 = vmatpush1.xpose.msra.mxu0 0.0
  %490 = vmatprep.subr.mxu0 0.0
  %491 = vmatpush1.xpose.msra.mxu0 0.0
  %492 = vmatprep.subr.mxu0 0.0
  %493 = vmatpush1.xpose.msra.mxu0 0.0
  %494 = vmatprep.subr.mxu0 0.0
  %495 = vmatpush1.xpose.msra.mxu0 0.0
  %496 = vmatprep.subr.mxu0 0.0
  %497 = vmatpush1.xpose.msra.mxu0 0.0
  %498 = vmatprep.subr.mxu0 0.0
  %499 = vmatpush1.xpose.msra.mxu0 0.0
  %500 = vmatprep.subr.mxu0 0.0
  %501 = vmatpush1.xpose.msra.mxu0 0.0
  %502 = vmatprep.subr.mxu0 0.0
  %503 = vmatpush1.xpose.msra.mxu0 0.0
  %504 = vmatprep.subr.mxu0 0.0
  %505 = vmatpush1.xpose.msra.mxu0 0.0
  %506 = vmatprep.subr.mxu0 0.0
  %507 = vmatpush1.xpose.msra.mxu0 0.0
  %508 = vmatprep.subr.mxu0 0.0
  %509 = vmatpush1.xpose.msra.mxu0 0.0
  %510 = vmatprep.subr.mxu0 0.0
  %511 = vmatpush1.xpose.msra.mxu0 0.0
  %512 = vmatprep.subr.mxu0 0.0
  %513 = vmatpush1.xpose.msra.mxu0 0.0
  %514 = vmatprep.mubr.f32.mxu0 0.0
  %v515 = vand.u32 %v69, 4294901760
  %v516 = vsub.f32 %v69, %v515
  %517 = vmatmul.mubr.f32.gmra.mrb[0].mxu0 %v516
  %v518 = vpop.f32.mrb[0].mxu0
  %v519 = vadd.f32 %v397, %v518
  %v520 = vpop.f32.mrb[0].mxu0
  %521 = vmatprep.mubr.f32.mxu0 0.0
  %v522 = vand.u32 %v72, 4294901760
  %v523 = vsub.f32 %v72, %v522
  %524 = vmatmul.mubr.f32.gmra.mrb[0].mxu0 %v523
  %v525 = vpop.f32.mrb[0].mxu0
  %v526 = vadd.f32 %v403, %v525
  %v527 = vpop.f32.mrb[0].mxu0
  %528 = vmatprep.mubr.f32.mxu0 0.0
  %v529 = vand.u32 %v75, 4294901760
  %v530 = vsub.f32 %v75, %v529
  %531 = vmatmul.mubr.f32.gmra.mrb[0].mxu0 %v530
  %v532 = vpop.f32.mrb[0].mxu0
  %v533 = vadd.f32 %v409, %v532
  %v534 = vpop.f32.mrb[0].mxu0
  %535 = vmatprep.mubr.f32.mxu0 0.0
  %v536 = vand.u32 %v78, 4294901760
  %v537 = vsub.f32 %v78, %v536
  %538 = vmatmul.mubr.f32.gmra.mrb[0].mxu0 %v537
  %v539 = vpop.f32.mrb[0].mxu0
  %v540 = vadd.f32 %v415, %v539
  %v541 = vpop.f32.mrb[0].mxu0
  %542 = vdwg.mxu0
  %543 = vmatprep.subr.mxu0 0.0
  %v544 = vand.u32 %v81, 4294901760
  %545 = vmatpush1.xpose.msra.mxu0 %v544
  %546 = vmatprep.subr.mxu0 0.0
  %v547 = vand.u32 %v84, 4294901760
  %548 = vmatpush1.xpose.msra.mxu0 %v547
  %549 = vmatprep.subr.mxu0 0.0
  %v550 = vand.u32 %v87, 4294901760
  %551 = vmatpush1.xpose.msra.mxu0 %v550
  %552 = vmatprep.subr.mxu0 0.0
  %v553 = vand.u32 %v90, 4294901760
  %554 = vmatpush1.xpose.msra.mxu0 %v553
  %555 = vmatprep.subr.mxu0 0.0
  %v556 = vand.u32 %v93, 4294901760
  %557 = vmatpush1.xpose.msra.mxu0 %v556
  %558 = vmatprep.subr.mxu0 0.0
  %v559 = vand.u32 %v96, 4294901760
  %560 = vmatpush1.xpose.msra.mxu0 %v559
  %561 = vmatprep.subr.mxu0 0.0
  %v562 = vand.u32 %v99, 4294901760
  %563 = vmatpush1.xpose.msra.mxu0 %v562
  %564 = vmatprep.subr.mxu0 0.0
  %v565 = vand.u32 %v102, 4294901760
  %566 = vmatpush1.xpose.msra.mxu0 %v565
  %567 = vmatprep.subr.mxu0 0.0
  %v568 = vand.u32 %v105, 4294901760
  %569 = vmatpush1.xpose.msra.mxu0 %v568
  %570 = vmatprep.subr.mxu0 0.0
  %v571 = vand.u32 %v108, 4294901760
  %572 = vmatpush1.xpose.msra.mxu0 %v571
  %573 = vmatprep.subr.mxu0 0.0
  %v574 = vand.u32 %v111, 4294901760
  %575 = vmatpush1.xpose.msra.mxu0 %v574
  %576 = vmatprep.subr.mxu0 0.0
  %v577 = vand.u32 %v114, 4294901760
  %578 = vmatpush1.xpose.msra.mxu0 %v577
  %579 = vmatprep.subr.mxu0 0.0
  %v580 = vand.u32 %v117, 4294901760
  %581 = vmatpush1.xpose.msra.mxu0 %v580
  %582 = vmatprep.subr.mxu0 0.0
  %v583 = vand.u32 %v120, 4294901760
  %584 = vmatpush1.xpose.msra.mxu0 %v583
  %585 = vmatprep.subr.mxu0 0.0
  %v586 = vand.u32 %v123, 4294901760
  %587 = vmatpush1.xpose.msra.mxu0 %v586
  %588 = vmatprep.subr.mxu0 0.0
  %v589 = vand.u32 %v126, 4294901760
  %590 = vmatpush1.xpose.msra.mxu0 %v589
  %591 = vmatprep.subr.mxu0 0.0
  %592 = vmatpush1.xpose.msra.mxu0 0.0
  %593 = vmatprep.subr.mxu0 0.0
  %594 = vmatpush1.xpose.msra.mxu0 0.0
  %595 = vmatprep.subr.mxu0 0.0
  %596 = vmatpush1.xpose.msra.mxu0 0.0
  %597 = vmatprep.subr.mxu0 0.0
  %598 = vmatpush1.xpose.msra.mxu0 0.0
  %599 = vmatprep.subr.mxu0 0.0
  %600 = vmatpush1.xpose.msra.mxu0 0.0
  %601 = vmatprep.subr.mxu0 0.0
  %602 = vmatpush1.xpose.msra.mxu0 0.0
  %603 = vmatprep.subr.mxu0 0.0
  %604 = vmatpush1.xpose.msra.mxu0 0.0
  %605 = vmatprep.subr.mxu0 0.0
  %606 = vmatpush1.xpose.msra.mxu0 0.0
  %607 = vmatprep.subr.mxu0 0.0
  %608 = vmatpush1.xpose.msra.mxu0 0.0
  %609 = vmatprep.subr.mxu0 0.0
  %610 = vmatpush1.xpose.msra.mxu0 0.0
  %611 = vmatprep.subr.mxu0 0.0
  %612 = vmatpush1.xpose.msra.mxu0 0.0
  %613 = vmatprep.subr.mxu0 0.0
  %614 = vmatpush1.xpose.msra.mxu0 0.0
  %615 = vmatprep.subr.mxu0 0.0
  %616 = vmatpush1.xpose.msra.mxu0 0.0
  %617 = vmatprep.subr.mxu0 0.0
  %618 = vmatpush1.xpose.msra.mxu0 0.0
  %619 = vmatprep.subr.mxu0 0.0
  %620 = vmatpush1.xpose.msra.mxu0 0.0
  %621 = vmatprep.subr.mxu0 0.0
  %622 = vmatpush1.xpose.msra.mxu0 0.0
  %623 = vmatprep.mubr.f32.mxu0 0.0
  %v624 = vand.u32 %v69, 4294901760
  %v625 = vsub.f32 %v69, %v624
  %v626 = vand.u32 %v625, 4294901760
  %627 = vmatmul.mubr.f32.gmra.mrb[0].mxu0 %v626
  %v628 = vpop.f32.mrb[0].mxu0
  %v629 = vadd.f32 %v519, %v628
  %v630 = vpop.f32.mrb[0].mxu0
  %631 = vmatprep.mubr.f32.mxu0 0.0
  %v632 = vand.u32 %v72, 4294901760
  %v633 = vsub.f32 %v72, %v632
  %v634 = vand.u32 %v633, 4294901760
  %635 = vmatmul.mubr.f32.gmra.mrb[0].mxu0 %v634
  %v636 = vpop.f32.mrb[0].mxu0
  %v637 = vadd.f32 %v526, %v636
  %v638 = vpop.f32.mrb[0].mxu0
  %639 = vmatprep.mubr.f32.mxu0 0.0
  %v640 = vand.u32 %v75, 4294901760
  %v641 = vsub.f32 %v75, %v640
  %v642 = vand.u32 %v641, 4294901760
  %643 = vmatmul.mubr.f32.gmra.mrb[0].mxu0 %v642
  %v644 = vpop.f32.mrb[0].mxu0
  %v645 = vadd.f32 %v533, %v644
  %v646 = vpop.f32.mrb[0].mxu0
  %647 = vmatprep.mubr.f32.mxu0 0.0
  %v648 = vand.u32 %v78, 4294901760
  %v649 = vsub.f32 %v78, %v648
  %v650 = vand.u32 %v649, 4294901760
  %651 = vmatmul.mubr.f32.gmra.mrb[0].mxu0 %v650
  %v652 = vpop.f32.mrb[0].mxu0
  %v653 = vadd.f32 %v540, %v652
  %v654 = vpop.f32.mrb[0].mxu0
  %655 = vdwg.mxu0
  %656 = vmatprep.subr.mxu0 0.0
  %v657 = vand.u32 %v81, 4294901760
  %v658 = vsub.f32 %v81, %v657
  %v659 = vand.u32 %v658, 4294901760
  %660 = vmatpush1.xpose.msra.mxu0 %v659
  %661 = vmatprep.subr.mxu0 0.0
  %v662 = vand.u32 %v84, 4294901760
  %v663 = vsub.f32 %v84, %v662
  %v664 = vand.u32 %v663, 4294901760
  %665 = vmatpush1.xpose.msra.mxu0 %v664
  %666 = vmatprep.subr.mxu0 0.0
  %v667 = vand.u32 %v87, 4294901760
  %v668 = vsub.f32 %v87, %v667
  %v669 = vand.u32 %v668, 4294901760
  %670 = vmatpush1.xpose.msra.mxu0 %v669
  %671 = vmatprep.subr.mxu0 0.0
  %v672 = vand.u32 %v90, 4294901760
  %v673 = vsub.f32 %v90, %v672
  %v674 = vand.u32 %v673, 4294901760
  %675 = vmatpush1.xpose.msra.mxu0 %v674
  %676 = vmatprep.subr.mxu0 0.0
  %v677 = vand.u32 %v93, 4294901760
  %v678 = vsub.f32 %v93, %v677
  %v679 = vand.u32 %v678, 4294901760
  %680 = vmatpush1.xpose.msra.mxu0 %v679
  %681 = vmatprep.subr.mxu0 0.0
  %v682 = vand.u32 %v96, 4294901760
  %v683 = vsub.f32 %v96, %v682
  %v684 = vand.u32 %v683, 4294901760
  %685 = vmatpush1.xpose.msra.mxu0 %v684
  %686 = vmatprep.subr.mxu0 0.0
  %v687 = vand.u32 %v99, 4294901760
  %v688 = vsub.f32 %v99, %v687
  %v689 = vand.u32 %v688, 4294901760
  %690 = vmatpush1.xpose.msra.mxu0 %v689
  %691 = vmatprep.subr.mxu0 0.0
  %v692 = vand.u32 %v102, 4294901760
  %v693 = vsub.f32 %v102, %v692
  %v694 = vand.u32 %v693, 4294901760
  %695 = vmatpush1.xpose.msra.mxu0 %v694
  %696 = vmatprep.subr.mxu0 0.0
  %v697 = vand.u32 %v105, 4294901760
  %v698 = vsub.f32 %v105, %v697
  %v699 = vand.u32 %v698, 4294901760
  %700 = vmatpush1.xpose.msra.mxu0 %v699
  %701 = vmatprep.subr.mxu0 0.0
  %v702 = vand.u32 %v108, 4294901760
  %v703 = vsub.f32 %v108, %v702
  %v704 = vand.u32 %v703, 4294901760
  %705 = vmatpush1.xpose.msra.mxu0 %v704
  %706 = vmatprep.subr.mxu0 0.0
  %v707 = vand.u32 %v111, 4294901760
  %v708 = vsub.f32 %v111, %v707
  %v709 = vand.u32 %v708, 4294901760
  %710 = vmatpush1.xpose.msra.mxu0 %v709
  %711 = vmatprep.subr.mxu0 0.0
  %v712 = vand.u32 %v114, 4294901760
  %v713 = vsub.f32 %v114, %v712
  %v714 = vand.u32 %v713, 4294901760
  %715 = vmatpush1.xpose.msra.mxu0 %v714
  %716 = vmatprep.subr.mxu0 0.0
  %v717 = vand.u32 %v117, 4294901760
  %v718 = vsub.f32 %v117, %v717
  %v719 = vand.u32 %v718, 4294901760
  %720 = vmatpush1.xpose.msra.mxu0 %v719
  %721 = vmatprep.subr.mxu0 0.0
  %v722 = vand.u32 %v120, 4294901760
  %v723 = vsub.f32 %v120, %v722
  %v724 = vand.u32 %v723, 4294901760
  %725 = vmatpush1.xpose.msra.mxu0 %v724
  %726 = vmatprep.subr.mxu0 0.0
  %v727 = vand.u32 %v123, 4294901760
  %v728 = vsub.f32 %v123, %v727
  %v729 = vand.u32 %v728, 4294901760
  %730 = vmatpush1.xpose.msra.mxu0 %v729
  %731 = vmatprep.subr.mxu0 0.0
  %v732 = vand.u32 %v126, 4294901760
  %v733 = vsub.f32 %v126, %v732
  %v734 = vand.u32 %v733, 4294901760
  %735 = vmatpush1.xpose.msra.mxu0 %v734
  %736 = vmatprep.subr.mxu0 0.0
  %737 = vmatpush1.xpose.msra.mxu0 0.0
  %738 = vmatprep.subr.mxu0 0.0
  %739 = vmatpush1.xpose.msra.mxu0 0.0
  %740 = vmatprep.subr.mxu0 0.0
  %741 = vmatpush1.xpose.msra.mxu0 0.0
  %742 = vmatprep.subr.mxu0 0.0
  %743 = vmatpush1.xpose.msra.mxu0 0.0
  %744 = vmatprep.subr.mxu0 0.0
  %745 = vmatpush1.xpose.msra.mxu0 0.0
  %746 = vmatprep.subr.mxu0 0.0
  %747 = vmatpush1.xpose.msra.mxu0 0.0
  %748 = vmatprep.subr.mxu0 0.0
  %749 = vmatpush1.xpose.msra.mxu0 0.0
  %750 = vmatprep.subr.mxu0 0.0
  %751 = vmatpush1.xpose.msra.mxu0 0.0
  %752 = vmatprep.subr.mxu0 0.0
  %753 = vmatpush1.xpose.msra.mxu0 0.0
  %754 = vmatprep.subr.mxu0 0.0
  %755 = vmatpush1.xpose.msra.mxu0 0.0
  %756 = vmatprep.subr.mxu0 0.0
  %757 = vmatpush1.xpose.msra.mxu0 0.0
  %758 = vmatprep.subr.mxu0 0.0
  %759 = vmatpush1.xpose.msra.mxu0 0.0
  %760 = vmatprep.subr.mxu0 0.0
  %761 = vmatpush1.xpose.msra.mxu0 0.0
  %762 = vmatprep.subr.mxu0 0.0
  %763 = vmatpush1.xpose.msra.mxu0 0.0
  %764 = vmatprep.subr.mxu0 0.0
  %765 = vmatpush1.xpose.msra.mxu0 0.0
  %766 = vmatprep.subr.mxu0 0.0
  %767 = vmatpush1.xpose.msra.mxu0 0.0
  %768 = vmatprep.mubr.f32.mxu0 0.0
  %v769 = vand.u32 %v69, 4294901760
  %770 = vmatmul.mubr.f32.gmra.mrb[0].mxu0 %v769
  %v771 = vpop.f32.mrb[0].mxu0
  %v772 = vadd.f32 %v629, %v771
  %v773 = vpop.f32.mrb[0].mxu0
  %774 = vmatprep.mubr.f32.mxu0 0.0
  %v775 = vand.u32 %v72, 4294901760
  %776 = vmatmul.mubr.f32.gmra.mrb[0].mxu0 %v775
  %v777 = vpop.f32.mrb[0].mxu0
  %v778 = vadd.f32 %v637, %v777
  %v779 = vpop.f32.mrb[0].mxu0
  %780 = vmatprep.mubr.f32.mxu0 0.0
  %v781 = vand.u32 %v75, 4294901760
  %782 = vmatmul.mubr.f32.gmra.mrb[0].mxu0 %v781
  %v783 = vpop.f32.mrb[0].mxu0
  %v784 = vadd.f32 %v645, %v783
  %v785 = vpop.f32.mrb[0].mxu0
  %786 = vmatprep.mubr.f32.mxu0 0.0
  %v787 = vand.u32 %v78, 4294901760
  %788 = vmatmul.mubr.f32.gmra.mrb[0].mxu0 %v787
  %v789 = vpop.f32.mrb[0].mxu0
  %v790 = vadd.f32 %v653, %v789
  %v791 = vpop.f32.mrb[0].mxu0
  %792 = vdwg.mxu0
  %793 = vmatprep.subr.mxu0 0.0
  %v794 = vand.u32 %v81, 4294901760
  %795 = vmatpush1.xpose.msra.mxu0 %v794
  %796 = vmatprep.subr.mxu0 0.0
  %v797 = vand.u32 %v84, 4294901760
  %798 = vmatpush1.xpose.msra.mxu0 %v797
  %799 = vmatprep.subr.mxu0 0.0
  %v800 = vand.u32 %v87, 4294901760
  %801 = vmatpush1.xpose.msra.mxu0 %v800
  %802 = vmatprep.subr.mxu0 0.0
  %v803 = vand.u32 %v90, 4294901760
  %804 = vmatpush1.xpose.msra.mxu0 %v803
  %805 = vmatprep.subr.mxu0 0.0
  %v806 = vand.u32 %v93, 4294901760
  %807 = vmatpush1.xpose.msra.mxu0 %v806
  %808 = vmatprep.subr.mxu0 0.0
  %v809 = vand.u32 %v96, 4294901760
  %810 = vmatpush1.xpose.msra.mxu0 %v809
  %811 = vmatprep.subr.mxu0 0.0
  %v812 = vand.u32 %v99, 4294901760
  %813 = vmatpush1.xpose.msra.mxu0 %v812
  %814 = vmatprep.subr.mxu0 0.0
  %v815 = vand.u32 %v102, 4294901760
  %816 = vmatpush1.xpose.msra.mxu0 %v815
  %817 = vmatprep.subr.mxu0 0.0
  %v818 = vand.u32 %v105, 4294901760
  %819 = vmatpush1.xpose.msra.mxu0 %v818
  %820 = vmatprep.subr.mxu0 0.0
  %v821 = vand.u32 %v108, 4294901760
  %822 = vmatpush1.xpose.msra.mxu0 %v821
  %823 = vmatprep.subr.mxu0 0.0
  %v824 = vand.u32 %v111, 4294901760
  %825 = vmatpush1.xpose.msra.mxu0 %v824
  %826 = vmatprep.subr.mxu0 0.0
  %v827 = vand.u32 %v114, 4294901760
  %828 = vmatpush1.xpose.msra.mxu0 %v827
  %829 = vmatprep.subr.mxu0 0.0
  %v830 = vand.u32 %v117, 4294901760
  %831 = vmatpush1.xpose.msra.mxu0 %v830
  %832 = vmatprep.subr.mxu0 0.0
  %v833 = vand.u32 %v120, 4294901760
  %834 = vmatpush1.xpose.msra.mxu0 %v833
  %835 = vmatprep.subr.mxu0 0.0
  %v836 = vand.u32 %v123, 4294901760
  %837 = vmatpush1.xpose.msra.mxu0 %v836
  %838 = vmatprep.subr.mxu0 0.0
  %v839 = vand.u32 %v126, 4294901760
  %840 = vmatpush1.xpose.msra.mxu0 %v839
  %841 = vmatprep.subr.mxu0 0.0
  %842 = vmatpush1.xpose.msra.mxu0 0.0
  %843 = vmatprep.subr.mxu0 0.0
  %844 = vmatpush1.xpose.msra.mxu0 0.0
  %845 = vmatprep.subr.mxu0 0.0
  %846 = vmatpush1.xpose.msra.mxu0 0.0
  %847 = vmatprep.subr.mxu0 0.0
  %848 = vmatpush1.xpose.msra.mxu0 0.0
  %849 = vmatprep.subr.mxu0 0.0
  %850 = vmatpush1.xpose.msra.mxu0 0.0
  %851 = vmatprep.subr.mxu0 0.0
  %852 = vmatpush1.xpose.msra.mxu0 0.0
  %853 = vmatprep.subr.mxu0 0.0
  %854 = vmatpush1.xpose.msra.mxu0 0.0
  %855 = vmatprep.subr.mxu0 0.0
  %856 = vmatpush1.xpose.msra.mxu0 0.0
  %857 = vmatprep.subr.mxu0 0.0
  %858 = vmatpush1.xpose.msra.mxu0 0.0
  %859 = vmatprep.subr.mxu0 0.0
  %860 = vmatpush1.xpose.msra.mxu0 0.0
  %861 = vmatprep.subr.mxu0 0.0
  %862 = vmatpush1.xpose.msra.mxu0 0.0
  %863 = vmatprep.subr.mxu0 0.0
  %864 = vmatpush1.xpose.msra.mxu0 0.0
  %865 = vmatprep.subr.mxu0 0.0
  %866 = vmatpush1.xpose.msra.mxu0 0.0
  %867 = vmatprep.subr.mxu0 0.0
  %868 = vmatpush1.xpose.msra.mxu0 0.0
  %869 = vmatprep.subr.mxu0 0.0
  %870 = vmatpush1.xpose.msra.mxu0 0.0
  %871 = vmatprep.subr.mxu0 0.0
  %872 = vmatpush1.xpose.msra.mxu0 0.0
  %873 = vmatprep.mubr.f32.mxu0 0.0
  %v874 = vand.u32 %v69, 4294901760
  %875 = vmatmul.mubr.f32.gmra.mrb[0].mxu0 %v874
  %v876 = vpop.f32.mrb[0].mxu0
  %v877 = vadd.f32 %v772, %v876
  %v878 = vpop.f32.mrb[0].mxu0
  %879 = vmatprep.mubr.f32.mxu0 0.0
  %v880 = vand.u32 %v72, 4294901760
  %881 = vmatmul.mubr.f32.gmra.mrb[0].mxu0 %v880
  %v882 = vpop.f32.mrb[0].mxu0
  %v883 = vadd.f32 %v778, %v882
  %v884 = vpop.f32.mrb[0].mxu0
  %885 = vmatprep.mubr.f32.mxu0 0.0
  %v886 = vand.u32 %v75, 4294901760
  %887 = vmatmul.mubr.f32.gmra.mrb[0].mxu0 %v886
  %v888 = vpop.f32.mrb[0].mxu0
  %v889 = vadd.f32 %v784, %v888
  %v890 = vpop.f32.mrb[0].mxu0
  %891 = vmatprep.mubr.f32.mxu0 0.0
  %v892 = vand.u32 %v78, 4294901760
  %893 = vmatmul.mubr.f32.gmra.mrb[0].mxu0 %v892
  %v894 = vpop.f32.mrb[0].mxu0
  %v895 = vadd.f32 %v790, %v894
  %v896 = vpop.f32.mrb[0].mxu0
  %897 = vdwg.mxu0
  %v898 = vtanh.pop %v877
  %v899 = vtanh.pop %v883
  %v900 = vtanh.pop %v889
  %v901 = vtanh.pop %v895
  %v902 = vld [vmem:[%s3] sm:$0xff]
  %v903 = vld [vmem:[%s4] sm:$0xff]
  %905 = vset.pattern.permute.xlu0 0
  %906 = vperm.xlu0 %905, %v903
  %v907 = vpop.permute.xlu0 %906
  %vm909 = vcmask 261120
  %v911 = vsel %vm909, %v902, 0
  %913 = vmatprep.subr.mxu0 0.0
  %v914 = vand.u32 %v898, 4294901760
  %915 = vmatpush1.msra.mxu0 %v914
  %916 = vmatprep.subr.mxu0 0.0
  %v917 = vand.u32 %v899, 4294901760
  %918 = vmatpush1.msra.mxu0 %v917
  %919 = vmatprep.subr.mxu0 0.0
  %v920 = vand.u32 %v900, 4294901760
  %921 = vmatpush1.msra.mxu0 %v920
  %922 = vmatprep.subr.mxu0 0.0
  %v923 = vand.u32 %v901, 4294901760
  %924 = vmatpush1.msra.mxu0 %v923
  %925 = vmatprep.subr.mxu0 0.0
  %926 = vmatpush1.msra.mxu0 0.0
  %927 = vmatprep.subr.mxu0 0.0
  %928 = vmatpush1.msra.mxu0 0.0
  %929 = vmatprep.subr.mxu0 0.0
  %930 = vmatpush1.msra.mxu0 0.0
  %931 = vmatprep.subr.mxu0 0.0
  %932 = vmatpush1.msra.mxu0 0.0
  %933 = vmatprep.subr.mxu0 0.0
  %934 = vmatpush1.msra.mxu0 0.0
  %935 = vmatprep.subr.mxu0 0.0
  %936 = vmatpush1.msra.mxu0 0.0
  %937 = vmatprep.subr.mxu0 0.0
  %938 = vmatpush1.msra.mxu0 0.0
  %939 = vmatprep.subr.mxu0 0.0
  %940 = vmatpush1.msra.mxu0 0.0
  %941 = vmatprep.subr.mxu0 0.0
  %942 = vmatpush1.msra.mxu0 0.0
  %943 = vmatprep.subr.mxu0 0.0
  %944 = vmatpush1.msra.mxu0 0.0
  %945 = vmatprep.subr.mxu0 0.0
  %946 = vmatpush1.msra.mxu0 0.0
  %947 = vmatprep.subr.mxu0 0.0
  %948 = vmatpush1.msra.mxu0 0.0
  %949 = vmatprep.subr.mxu0 0.0
  %950 = vmatpush1.msra.mxu0 0.0
  %951 = vmatprep.subr.mxu0 0.0
  %952 = vmatpush1.msra.mxu0 0.0
  %953 = vmatprep.subr.mxu0 0.0
  %954 = vmatpush1.msra.mxu0 0.0
  %955 = vmatprep.subr.mxu0 0.0
  %956 = vmatpush1.msra.mxu0 0.0
  %957 = vmatprep.subr.mxu0 0.0
  %958 = vmatpush1.msra.mxu0 0.0
  %959 = vmatprep.subr.mxu0 0.0
  %960 = vmatpush1.msra.mxu0 0.0
  %961 = vmatprep.subr.mxu0 0.0
  %962 = vmatpush1.msra.mxu0 0.0
  %963 = vmatprep.subr.mxu0 0.0
  %964 = vmatpush1.msra.mxu0 0.0
  %965 = vmatprep.subr.mxu0 0.0
  %966 = vmatpush1.msra.mxu0 0.0
  %967 = vmatprep.subr.mxu0 0.0
  %968 = vmatpush1.msra.mxu0 0.0
  %969 = vmatprep.subr.mxu0 0.0
  %970 = vmatpush1.msra.mxu0 0.0
  %971 = vmatprep.subr.mxu0 0.0
  %972 = vmatpush1.msra.mxu0 0.0
  %973 = vmatprep.subr.mxu0 0.0
  %974 = vmatpush1.msra.mxu0 0.0
  %975 = vmatprep.subr.mxu0 0.0
  %976 = vmatpush1.msra.mxu0 0.0
  %977 = vmatprep.subr.mxu0 0.0
  %978 = vmatpush1.msra.mxu0 0.0
  %979 = vmatprep.subr.mxu0 0.0
  %980 = vmatpush1.msra.mxu0 0.0
  %981 = vmatprep.mubr.f32.mxu0 0.0
  %v982 = vand.u32 %v911, 4294901760
  %v983 = vsub.f32 %v911, %v982
  %v984 = vand.u32 %v983, 4294901760
  %v985 = vsub.f32 %v983, %v984
  %v986 = vand.u32 %v985, 4294901760
  %987 = vmatmul.mubr.f32.gmra.mrb[0].mxu0 %v986
  %v988 = vpop.f32.mrb[0].mxu0
  %v989 = vadd.f32 %v907, %v988
  %v990 = vpop.f32.mrb[0].mxu0
  %991 = vdwg.mxu0
  %992 = vmatprep.subr.mxu0 0.0
  %v993 = vand.u32 %v898, 4294901760
  %v994 = vsub.f32 %v898, %v993
  %v995 = vand.u32 %v994, 4294901760
  %v996 = vsub.f32 %v994, %v995
  %v997 = vand.u32 %v996, 4294901760
  %998 = vmatpush1.msra.mxu0 %v997
  %999 = vmatprep.subr.mxu0 0.0
  %v1000 = vand.u32 %v899, 4294901760
  %v1001 = vsub.f32 %v899, %v1000
  %v1002 = vand.u32 %v1001, 4294901760
  %v1003 = vsub.f32 %v1001, %v1002
  %v1004 = vand.u32 %v1003, 4294901760
  %1005 = vmatpush1.msra.mxu0 %v1004
  %1006 = vmatprep.subr.mxu0 0.0
  %v1007 = vand.u32 %v900, 4294901760
  %v1008 = vsub.f32 %v900, %v1007
  %v1009 = vand.u32 %v1008, 4294901760
  %v1010 = vsub.f32 %v1008, %v1009
  %v1011 = vand.u32 %v1010, 4294901760
  %1012 = vmatpush1.msra.mxu0 %v1011
  %1013 = vmatprep.subr.mxu0 0.0
  %v1014 = vand.u32 %v901, 4294901760
  %v1015 = vsub.f32 %v901, %v1014
  %v1016 = vand.u32 %v1015, 4294901760
  %v1017 = vsub.f32 %v1015, %v1016
  %v1018 = vand.u32 %v1017, 4294901760
  %1019 = vmatpush1.msra.mxu0 %v1018
  %1020 = vmatprep.subr.mxu0 0.0
  %1021 = vmatpush1.msra.mxu0 0.0
  %1022 = vmatprep.subr.mxu0 0.0
  %1023 = vmatpush1.msra.mxu0 0.0
  %1024 = vmatprep.subr.mxu0 0.0
  %1025 = vmatpush1.msra.mxu0 0.0
  %1026 = vmatprep.subr.mxu0 0.0
  %1027 = vmatpush1.msra.mxu0 0.0
  %1028 = vmatprep.subr.mxu0 0.0
  %1029 = vmatpush1.msra.mxu0 0.0
  %1030 = vmatprep.subr.mxu0 0.0
  %1031 = vmatpush1.msra.mxu0 0.0
  %1032 = vmatprep.subr.mxu0 0.0
  %1033 = vmatpush1.msra.mxu0 0.0
  %1034 = vmatprep.subr.mxu0 0.0
  %1035 = vmatpush1.msra.mxu0 0.0
  %1036 = vmatprep.subr.mxu0 0.0
  %1037 = vmatpush1.msra.mxu0 0.0
  %1038 = vmatprep.subr.mxu0 0.0
  %1039 = vmatpush1.msra.mxu0 0.0
  %1040 = vmatprep.subr.mxu0 0.0
  %1041 = vmatpush1.msra.mxu0 0.0
  %1042 = vmatprep.subr.mxu0 0.0
  %1043 = vmatpush1.msra.mxu0 0.0
  %1044 = vmatprep.subr.mxu0 0.0
  %1045 = vmatpush1.msra.mxu0 0.0
  %1046 = vmatprep.subr.mxu0 0.0
  %1047 = vmatpush1.msra.mxu0 0.0
  %1048 = vmatprep.subr.mxu0 0.0
  %1049 = vmatpush1.msra.mxu0 0.0
  %1050 = vmatprep.subr.mxu0 0.0
  %1051 = vmatpush1.msra.mxu0 0.0
  %1052 = vmatprep.subr.mxu0 0.0
  %1053 = vmatpush1.msra.mxu0 0.0
  %1054 = vmatprep.subr.mxu0 0.0
  %1055 = vmatpush1.msra.mxu0 0.0
  %1056 = vmatprep.subr.mxu0 0.0
  %1057 = vmatpush1.msra.mxu0 0.0
  %1058 = vmatprep.subr.mxu0 0.0
  %1059 = vmatpush1.msra.mxu0 0.0
  %1060 = vmatprep.subr.mxu0 0.0
  %1061 = vmatpush1.msra.mxu0 0.0
  %1062 = vmatprep.subr.mxu0 0.0
  %1063 = vmatpush1.msra.mxu0 0.0
  %1064 = vmatprep.subr.mxu0 0.0
  %1065 = vmatpush1.msra.mxu0 0.0
  %1066 = vmatprep.subr.mxu0 0.0
  %1067 = vmatpush1.msra.mxu0 0.0
  %1068 = vmatprep.subr.mxu0 0.0
  %1069 = vmatpush1.msra.mxu0 0.0
  %1070 = vmatprep.subr.mxu0 0.0
  %1071 = vmatpush1.msra.mxu0 0.0
  %1072 = vmatprep.subr.mxu0 0.0
  %1073 = vmatpush1.msra.mxu0 0.0
  %1074 = vmatprep.subr.mxu0 0.0
  %1075 = vmatpush1.msra.mxu0 0.0
  %1076 = vmatprep.mubr.f32.mxu0 0.0
  %v1077 = vand.u32 %v911, 4294901760
  %1078 = vmatmul.mubr.f32.gmra.mrb[0].mxu0 %v1077
  %v1079 = vpop.f32.mrb[0].mxu0
  %v1080 = vadd.f32 %v989, %v1079
  %v1081 = vpop.f32.mrb[0].mxu0
  %1082 = vdwg.mxu0
  %1083 = vmatprep.subr.mxu0 0.0
  %v1084 = vand.u32 %v898, 4294901760
  %v1085 = vsub.f32 %v898, %v1084
  %1086 = vmatpush1.msra.mxu0 %v1085
  %1087 = vmatprep.subr.mxu0 0.0
  %v1088 = vand.u32 %v899, 4294901760
  %v1089 = vsub.f32 %v899, %v1088
  %1090 = vmatpush1.msra.mxu0 %v1089
  %1091 = vmatprep.subr.mxu0 0.0
  %v1092 = vand.u32 %v900, 4294901760
  %v1093 = vsub.f32 %v900, %v1092
  %1094 = vmatpush1.msra.mxu0 %v1093
  %1095 = vmatprep.subr.mxu0 0.0
  %v1096 = vand.u32 %v901, 4294901760
  %v1097 = vsub.f32 %v901, %v1096
  %1098 = vmatpush1.msra.mxu0 %v1097
  %1099 = vmatprep.subr.mxu0 0.0
  %1100 = vmatpush1.msra.mxu0 0.0
  %1101 = vmatprep.subr.mxu0 0.0
  %1102 = vmatpush1.msra.mxu0 0.0
  %1103 = vmatprep.subr.mxu0 0.0
  %1104 = vmatpush1.msra.mxu0 0.0
  %1105 = vmatprep.subr.mxu0 0.0
  %1106 = vmatpush1.msra.mxu0 0.0
  %1107 = vmatprep.subr.mxu0 0.0
  %1108 = vmatpush1.msra.mxu0 0.0
  %1109 = vmatprep.subr.mxu0 0.0
  %1110 = vmatpush1.msra.mxu0 0.0
  %1111 = vmatprep.subr.mxu0 0.0
  %1112 = vmatpush1.msra.mxu0 0.0
  %1113 = vmatprep.subr.mxu0 0.0
  %1114 = vmatpush1.msra.mxu0 0.0
  %1115 = vmatprep.subr.mxu0 0.0
  %1116 = vmatpush1.msra.mxu0 0.0
  %1117 = vmatprep.subr.mxu0 0.0
  %1118 = vmatpush1.msra.mxu0 0.0
  %1119 = vmatprep.subr.mxu0 0.0
  %1120 = vmatpush1.msra.mxu0 0.0
  %1121 = vmatprep.subr.mxu0 0.0
  %1122 = vmatpush1.msra.mxu0 0.0
  %1123 = vmatprep.subr.mxu0 0.0
  %1124 = vmatpush1.msra.mxu0 0.0
  %1125 = vmatprep.subr.mxu0 0.0
  %1126 = vmatpush1.msra.mxu0 0.0
  %1127 = vmatprep.subr.mxu0 0.0
  %1128 = vmatpush1.msra.mxu0 0.0
  %1129 = vmatprep.subr.mxu0 0.0
  %1130 = vmatpush1.msra.mxu0 0.0
  %1131 = vmatprep.subr.mxu0 0.0
  %1132 = vmatpush1.msra.mxu0 0.0
  %1133 = vmatprep.subr.mxu0 0.0
  %1134 = vmatpush1.msra.mxu0 0.0
  %1135 = vmatprep.subr.mxu0 0.0
  %1136 = vmatpush1.msra.mxu0 0.0
  %1137 = vmatprep.subr.mxu0 0.0
  %1138 = vmatpush1.msra.mxu0 0.0
  %1139 = vmatprep.subr.mxu0 0.0
  %1140 = vmatpush1.msra.mxu0 0.0
  %1141 = vmatprep.subr.mxu0 0.0
  %1142 = vmatpush1.msra.mxu0 0.0
  %1143 = vmatprep.subr.mxu0 0.0
  %1144 = vmatpush1.msra.mxu0 0.0
  %1145 = vmatprep.subr.mxu0 0.0
  %1146 = vmatpush1.msra.mxu0 0.0
  %1147 = vmatprep.subr.mxu0 0.0
  %1148 = vmatpush1.msra.mxu0 0.0
  %1149 = vmatprep.subr.mxu0 0.0
  %1150 = vmatpush1.msra.mxu0 0.0
  %1151 = vmatprep.subr.mxu0 0.0
  %1152 = vmatpush1.msra.mxu0 0.0
  %1153 = vmatprep.subr.mxu0 0.0
  %1154 = vmatpush1.msra.mxu0 0.0
  %1155 = vmatprep.mubr.f32.mxu0 0.0
  %v1156 = vand.u32 %v911, 4294901760
  %v1157 = vsub.f32 %v911, %v1156
  %1158 = vmatmul.mubr.f32.gmra.mrb[0].mxu0 %v1157
  %v1159 = vpop.f32.mrb[0].mxu0
  %v1160 = vadd.f32 %v1080, %v1159
  %v1161 = vpop.f32.mrb[0].mxu0
  %1162 = vdwg.mxu0
  %1163 = vmatprep.subr.mxu0 0.0
  %v1164 = vand.u32 %v898, 4294901760
  %1165 = vmatpush1.msra.mxu0 %v1164
  %1166 = vmatprep.subr.mxu0 0.0
  %v1167 = vand.u32 %v899, 4294901760
  %1168 = vmatpush1.msra.mxu0 %v1167
  %1169 = vmatprep.subr.mxu0 0.0
  %v1170 = vand.u32 %v900, 4294901760
  %1171 = vmatpush1.msra.mxu0 %v1170
  %1172 = vmatprep.subr.mxu0 0.0
  %v1173 = vand.u32 %v901, 4294901760
  %1174 = vmatpush1.msra.mxu0 %v1173
  %1175 = vmatprep.subr.mxu0 0.0
  %1176 = vmatpush1.msra.mxu0 0.0
  %1177 = vmatprep.subr.mxu0 0.0
  %1178 = vmatpush1.msra.mxu0 0.0
  %1179 = vmatprep.subr.mxu0 0.0
  %1180 = vmatpush1.msra.mxu0 0.0
  %1181 = vmatprep.subr.mxu0 0.0
  %1182 = vmatpush1.msra.mxu0 0.0
  %1183 = vmatprep.subr.mxu0 0.0
  %1184 = vmatpush1.msra.mxu0 0.0
  %1185 = vmatprep.subr.mxu0 0.0
  %1186 = vmatpush1.msra.mxu0 0.0
  %1187 = vmatprep.subr.mxu0 0.0
  %1188 = vmatpush1.msra.mxu0 0.0
  %1189 = vmatprep.subr.mxu0 0.0
  %1190 = vmatpush1.msra.mxu0 0.0
  %1191 = vmatprep.subr.mxu0 0.0
  %1192 = vmatpush1.msra.mxu0 0.0
  %1193 = vmatprep.subr.mxu0 0.0
  %1194 = vmatpush1.msra.mxu0 0.0
  %1195 = vmatprep.subr.mxu0 0.0
  %1196 = vmatpush1.msra.mxu0 0.0
  %1197 = vmatprep.subr.mxu0 0.0
  %1198 = vmatpush1.msra.mxu0 0.0
  %1199 = vmatprep.subr.mxu0 0.0
  %1200 = vmatpush1.msra.mxu0 0.0
  %1201 = vmatprep.subr.mxu0 0.0
  %1202 = vmatpush1.msra.mxu0 0.0
  %1203 = vmatprep.subr.mxu0 0.0
  %1204 = vmatpush1.msra.mxu0 0.0
  %1205 = vmatprep.subr.mxu0 0.0
  %1206 = vmatpush1.msra.mxu0 0.0
  %1207 = vmatprep.subr.mxu0 0.0
  %1208 = vmatpush1.msra.mxu0 0.0
  %1209 = vmatprep.subr.mxu0 0.0
  %1210 = vmatpush1.msra.mxu0 0.0
  %1211 = vmatprep.subr.mxu0 0.0
  %1212 = vmatpush1.msra.mxu0 0.0
  %1213 = vmatprep.subr.mxu0 0.0
  %1214 = vmatpush1.msra.mxu0 0.0
  %1215 = vmatprep.subr.mxu0 0.0
  %1216 = vmatpush1.msra.mxu0 0.0
  %1217 = vmatprep.subr.mxu0 0.0
  %1218 = vmatpush1.msra.mxu0 0.0
  %1219 = vmatprep.subr.mxu0 0.0
  %1220 = vmatpush1.msra.mxu0 0.0
  %1221 = vmatprep.subr.mxu0 0.0
  %1222 = vmatpush1.msra.mxu0 0.0
  %1223 = vmatprep.subr.mxu0 0.0
  %1224 = vmatpush1.msra.mxu0 0.0
  %1225 = vmatprep.subr.mxu0 0.0
  %1226 = vmatpush1.msra.mxu0 0.0
  %1227 = vmatprep.subr.mxu0 0.0
  %1228 = vmatpush1.msra.mxu0 0.0
  %1229 = vmatprep.subr.mxu0 0.0
  %1230 = vmatpush1.msra.mxu0 0.0
  %1231 = vmatprep.mubr.f32.mxu0 0.0
  %v1232 = vand.u32 %v911, 4294901760
  %v1233 = vsub.f32 %v911, %v1232
  %v1234 = vand.u32 %v1233, 4294901760
  %1235 = vmatmul.mubr.f32.gmra.mrb[0].mxu0 %v1234
  %v1236 = vpop.f32.mrb[0].mxu0
  %v1237 = vadd.f32 %v1160, %v1236
  %v1238 = vpop.f32.mrb[0].mxu0
  %1239 = vdwg.mxu0
  %1240 = vmatprep.subr.mxu0 0.0
  %v1241 = vand.u32 %v898, 4294901760
  %v1242 = vsub.f32 %v898, %v1241
  %v1243 = vand.u32 %v1242, 4294901760
  %1244 = vmatpush1.msra.mxu0 %v1243
  %1245 = vmatprep.subr.mxu0 0.0
  %v1246 = vand.u32 %v899, 4294901760
  %v1247 = vsub.f32 %v899, %v1246
  %v1248 = vand.u32 %v1247, 4294901760
  %1249 = vmatpush1.msra.mxu0 %v1248
  %1250 = vmatprep.subr.mxu0 0.0
  %v1251 = vand.u32 %v900, 4294901760
  %v1252 = vsub.f32 %v900, %v1251
  %v1253 = vand.u32 %v1252, 4294901760
  %1254 = vmatpush1.msra.mxu0 %v1253
  %1255 = vmatprep.subr.mxu0 0.0
  %v1256 = vand.u32 %v901, 4294901760
  %v1257 = vsub.f32 %v901, %v1256
  %v1258 = vand.u32 %v1257, 4294901760
  %1259 = vmatpush1.msra.mxu0 %v1258
  %1260 = vmatprep.subr.mxu0 0.0
  %1261 = vmatpush1.msra.mxu0 0.0
  %1262 = vmatprep.subr.mxu0 0.0
  %1263 = vmatpush1.msra.mxu0 0.0
  %1264 = vmatprep.subr.mxu0 0.0
  %1265 = vmatpush1.msra.mxu0 0.0
  %1266 = vmatprep.subr.mxu0 0.0
  %1267 = vmatpush1.msra.mxu0 0.0
  %1268 = vmatprep.subr.mxu0 0.0
  %1269 = vmatpush1.msra.mxu0 0.0
  %1270 = vmatprep.subr.mxu0 0.0
  %1271 = vmatpush1.msra.mxu0 0.0
  %1272 = vmatprep.subr.mxu0 0.0
  %1273 = vmatpush1.msra.mxu0 0.0
  %1274 = vmatprep.subr.mxu0 0.0
  %1275 = vmatpush1.msra.mxu0 0.0
  %1276 = vmatprep.subr.mxu0 0.0
  %1277 = vmatpush1.msra.mxu0 0.0
  %1278 = vmatprep.subr.mxu0 0.0
  %1279 = vmatpush1.msra.mxu0 0.0
  %1280 = vmatprep.subr.mxu0 0.0
  %1281 = vmatpush1.msra.mxu0 0.0
  %1282 = vmatprep.subr.mxu0 0.0
  %1283 = vmatpush1.msra.mxu0 0.0
  %1284 = vmatprep.subr.mxu0 0.0
  %1285 = vmatpush1.msra.mxu0 0.0
  %1286 = vmatprep.subr.mxu0 0.0
  %1287 = vmatpush1.msra.mxu0 0.0
  %1288 = vmatprep.subr.mxu0 0.0
  %1289 = vmatpush1.msra.mxu0 0.0
  %1290 = vmatprep.subr.mxu0 0.0
  %1291 = vmatpush1.msra.mxu0 0.0
  %1292 = vmatprep.subr.mxu0 0.0
  %1293 = vmatpush1.msra.mxu0 0.0
  %1294 = vmatprep.subr.mxu0 0.0
  %1295 = vmatpush1.msra.mxu0 0.0
  %1296 = vmatprep.subr.mxu0 0.0
  %1297 = vmatpush1.msra.mxu0 0.0
  %1298 = vmatprep.subr.mxu0 0.0
  %1299 = vmatpush1.msra.mxu0 0.0
  %1300 = vmatprep.subr.mxu0 0.0
  %1301 = vmatpush1.msra.mxu0 0.0
  %1302 = vmatprep.subr.mxu0 0.0
  %1303 = vmatpush1.msra.mxu0 0.0
  %1304 = vmatprep.subr.mxu0 0.0
  %1305 = vmatpush1.msra.mxu0 0.0
  %1306 = vmatprep.subr.mxu0 0.0
  %1307 = vmatpush1.msra.mxu0 0.0
  %1308 = vmatprep.subr.mxu0 0.0
  %1309 = vmatpush1.msra.mxu0 0.0
  %1310 = vmatprep.subr.mxu0 0.0
  %1311 = vmatpush1.msra.mxu0 0.0
  %1312 = vmatprep.subr.mxu0 0.0
  %1313 = vmatpush1.msra.mxu0 0.0
  %1314 = vmatprep.subr.mxu0 0.0
  %1315 = vmatpush1.msra.mxu0 0.0
  %1316 = vmatprep.mubr.f32.mxu0 0.0
  %v1317 = vand.u32 %v911, 4294901760
  %1318 = vmatmul.mubr.f32.gmra.mrb[0].mxu0 %v1317
  %v1319 = vpop.f32.mrb[0].mxu0
  %v1320 = vadd.f32 %v1237, %v1319
  %v1321 = vpop.f32.mrb[0].mxu0
  %1322 = vdwg.mxu0
  %1323 = vmatprep.subr.mxu0 0.0
  %v1324 = vand.u32 %v898, 4294901760
  %1325 = vmatpush1.msra.mxu0 %v1324
  %1326 = vmatprep.subr.mxu0 0.0
  %v1327 = vand.u32 %v899, 4294901760
  %1328 = vmatpush1.msra.mxu0 %v1327
  %1329 = vmatprep.subr.mxu0 0.0
  %v1330 = vand.u32 %v900, 4294901760
  %1331 = vmatpush1.msra.mxu0 %v1330
  %1332 = vmatprep.subr.mxu0 0.0
  %v1333 = vand.u32 %v901, 4294901760
  %1334 = vmatpush1.msra.mxu0 %v1333
  %1335 = vmatprep.subr.mxu0 0.0
  %1336 = vmatpush1.msra.mxu0 0.0
  %1337 = vmatprep.subr.mxu0 0.0
  %1338 = vmatpush1.msra.mxu0 0.0
  %1339 = vmatprep.subr.mxu0 0.0
  %1340 = vmatpush1.msra.mxu0 0.0
  %1341 = vmatprep.subr.mxu0 0.0
  %1342 = vmatpush1.msra.mxu0 0.0
  %1343 = vmatprep.subr.mxu0 0.0
  %1344 = vmatpush1.msra.mxu0 0.0
  %1345 = vmatprep.subr.mxu0 0.0
  %1346 = vmatpush1.msra.mxu0 0.0
  %1347 = vmatprep.subr.mxu0 0.0
  %1348 = vmatpush1.msra.mxu0 0.0
  %1349 = vmatprep.subr.mxu0 0.0
  %1350 = vmatpush1.msra.mxu0 0.0
  %1351 = vmatprep.subr.mxu0 0.0
  %1352 = vmatpush1.msra.mxu0 0.0
  %1353 = vmatprep.subr.mxu0 0.0
  %1354 = vmatpush1.msra.mxu0 0.0
  %1355 = vmatprep.subr.mxu0 0.0
  %1356 = vmatpush1.msra.mxu0 0.0
  %1357 = vmatprep.subr.mxu0 0.0
  %1358 = vmatpush1.msra.mxu0 0.0
  %1359 = vmatprep.subr.mxu0 0.0
  %1360 = vmatpush1.msra.mxu0 0.0
  %1361 = vmatprep.subr.mxu0 0.0
  %1362 = vmatpush1.msra.mxu0 0.0
  %1363 = vmatprep.subr.mxu0 0.0
  %1364 = vmatpush1.msra.mxu0 0.0
  %1365 = vmatprep.subr.mxu0 0.0
  %1366 = vmatpush1.msra.mxu0 0.0
  %1367 = vmatprep.subr.mxu0 0.0
  %1368 = vmatpush1.msra.mxu0 0.0
  %1369 = vmatprep.subr.mxu0 0.0
  %1370 = vmatpush1.msra.mxu0 0.0
  %1371 = vmatprep.subr.mxu0 0.0
  %1372 = vmatpush1.msra.mxu0 0.0
  %1373 = vmatprep.subr.mxu0 0.0
  %1374 = vmatpush1.msra.mxu0 0.0
  %1375 = vmatprep.subr.mxu0 0.0
  %1376 = vmatpush1.msra.mxu0 0.0
  %1377 = vmatprep.subr.mxu0 0.0
  %1378 = vmatpush1.msra.mxu0 0.0
  %1379 = vmatprep.subr.mxu0 0.0
  %1380 = vmatpush1.msra.mxu0 0.0
  %1381 = vmatprep.subr.mxu0 0.0
  %1382 = vmatpush1.msra.mxu0 0.0
  %1383 = vmatprep.subr.mxu0 0.0
  %1384 = vmatpush1.msra.mxu0 0.0
  %1385 = vmatprep.subr.mxu0 0.0
  %1386 = vmatpush1.msra.mxu0 0.0
  %1387 = vmatprep.subr.mxu0 0.0
  %1388 = vmatpush1.msra.mxu0 0.0
  %1389 = vmatprep.subr.mxu0 0.0
  %1390 = vmatpush1.msra.mxu0 0.0
  %1391 = vmatprep.mubr.f32.mxu0 0.0
  %v1392 = vand.u32 %v911, 4294901760
  %1393 = vmatmul.mubr.f32.gmra.mrb[0].mxu0 %v1392
  %v1394 = vpop.f32.mrb[0].mxu0
  %v1395 = vadd.f32 %v1320, %v1394
  %v1396 = vpop.f32.mrb[0].mxu0
  %1397 = vdwg.mxu0
  %v1398 = vld [vmem:[%s5] sm:$0x1]
  %v1399 = vmul.f32 %v898, %v898
  %v1400 = vmul.f32 %v899, %v899
  %v1401 = vmul.f32 %v900, %v900
  %v1402 = vmul.f32 %v901, %v901
  %v1403 = vsub.f32 1.0, %v1399
  %v1404 = vsub.f32 1.0, %v1400
  %v1405 = vsub.f32 1.0, %v1401
  %v1406 = vsub.f32 1.0, %v1402
  %v1408 = vsel %vm909, %v1398, 0
  %1410 = vmatprep.subr.mxu0 0.0
  %v1411 = vand.u32 %v1403, 4294901760
  %1412 = vmatpush1.msra.mxu0 %v1411
  %1413 = vmatprep.subr.mxu0 0.0
  %v1414 = vand.u32 %v1404, 4294901760
  %1415 = vmatpush1.msra.mxu0 %v1414
  %1416 = vmatprep.subr.mxu0 0.0
  %v1417 = vand.u32 %v1405, 4294901760
  %1418 = vmatpush1.msra.mxu0 %v1417
  %1419 = vmatprep.subr.mxu0 0.0
  %v1420 = vand.u32 %v1406, 4294901760
  %1421 = vmatpush1.msra.mxu0 %v1420
  %1422 = vmatprep.subr.mxu0 0.0
  %1423 = vmatpush1.msra.mxu0 0.0
  %1424 = vmatprep.subr.mxu0 0.0
  %1425 = vmatpush1.msra.mxu0 0.0
  %1426 = vmatprep.subr.mxu0 0.0
  %1427 = vmatpush1.msra.mxu0 0.0
  %1428 = vmatprep.subr.mxu0 0.0
  %1429 = vmatpush1.msra.mxu0 0.0
  %1430 = vmatprep.subr.mxu0 0.0
  %1431 = vmatpush1.msra.mxu0 0.0
  %1432 = vmatprep.subr.mxu0 0.0
  %1433 = vmatpush1.msra.mxu0 0.0
  %1434 = vmatprep.subr.mxu0 0.0
  %1435 = vmatpush1.msra.mxu0 0.0
  %1436 = vmatprep.subr.mxu0 0.0
  %1437 = vmatpush1.msra.mxu0 0.0
  %1438 = vmatprep.subr.mxu0 0.0
  %1439 = vmatpush1.msra.mxu0 0.0
  %1440 = vmatprep.subr.mxu0 0.0
  %1441 = vmatpush1.msra.mxu0 0.0
  %1442 = vmatprep.subr.mxu0 0.0
  %1443 = vmatpush1.msra.mxu0 0.0
  %1444 = vmatprep.subr.mxu0 0.0
  %1445 = vmatpush1.msra.mxu0 0.0
  %1446 = vmatprep.subr.mxu0 0.0
  %1447 = vmatpush1.msra.mxu0 0.0
  %1448 = vmatprep.subr.mxu0 0.0
  %1449 = vmatpush1.msra.mxu0 0.0
  %1450 = vmatprep.subr.mxu0 0.0
  %1451 = vmatpush1.msra.mxu0 0.0
  %1452 = vmatprep.subr.mxu0 0.0
  %1453 = vmatpush1.msra.mxu0 0.0
  %1454 = vmatprep.subr.mxu0 0.0
  %1455 = vmatpush1.msra.mxu0 0.0
  %1456 = vmatprep.subr.mxu0 0.0
  %1457 = vmatpush1.msra.mxu0 0.0
  %1458 = vmatprep.subr.mxu0 0.0
  %1459 = vmatpush1.msra.mxu0 0.0
  %1460 = vmatprep.subr.mxu0 0.0
  %1461 = vmatpush1.msra.mxu0 0.0
  %1462 = vmatprep.subr.mxu0 0.0
  %1463 = vmatpush1.msra.mxu0 0.0
  %1464 = vmatprep.subr.mxu0 0.0
  %1465 = vmatpush1.msra.mxu0 0.0
  %1466 = vmatprep.subr.mxu0 0.0
  %1467 = vmatpush1.msra.mxu0 0.0
  %1468 = vmatprep.subr.mxu0 0.0
  %1469 = vmatpush1.msra.mxu0 0.0
  %1470 = vmatprep.subr.mxu0 0.0
  %1471 = vmatpush1.msra.mxu0 0.0
  %1472 = vmatprep.subr.mxu0 0.0
  %1473 = vmatpush1.msra.mxu0 0.0
  %1474 = vmatprep.subr.mxu0 0.0
  %1475 = vmatpush1.msra.mxu0 0.0
  %1476 = vmatprep.subr.mxu0 0.0
  %1477 = vmatpush1.msra.mxu0 0.0
  %1478 = vmatprep.mubr.f32.mxu0 0.0
  %v1479 = vand.u32 %v1408, 4294901760
  %v1480 = vsub.f32 %v1408, %v1479
  %v1481 = vand.u32 %v1480, 4294901760
  %v1482 = vsub.f32 %v1480, %v1481
  %v1483 = vand.u32 %v1482, 4294901760
  %1484 = vmatmul.mubr.f32.gmra.mrb[0].mxu0 %v1483
  %v1485 = vpop.f32.mrb[0].mxu0
  %v1486 = vadd.f32 0.0, %v1485
  %v1487 = vpop.f32.mrb[0].mxu0
  %1488 = vdwg.mxu0
  %1489 = vmatprep.subr.mxu0 0.0
  %v1490 = vand.u32 %v1403, 4294901760
  %v1491 = vsub.f32 %v1403, %v1490
  %v1492 = vand.u32 %v1491, 4294901760
  %v1493 = vsub.f32 %v1491, %v1492
  %v1494 = vand.u32 %v1493, 4294901760
  %1495 = vmatpush1.msra.mxu0 %v1494
  %1496 = vmatprep.subr.mxu0 0.0
  %v1497 = vand.u32 %v1404, 4294901760
  %v1498 = vsub.f32 %v1404, %v1497
  %v1499 = vand.u32 %v1498, 4294901760
  %v1500 = vsub.f32 %v1498, %v1499
  %v1501 = vand.u32 %v1500, 4294901760
  %1502 = vmatpush1.msra.mxu0 %v1501
  %1503 = vmatprep.subr.mxu0 0.0
  %v1504 = vand.u32 %v1405, 4294901760
  %v1505 = vsub.f32 %v1405, %v1504
  %v1506 = vand.u32 %v1505, 4294901760
  %v1507 = vsub.f32 %v1505, %v1506
  %v1508 = vand.u32 %v1507, 4294901760
  %1509 = vmatpush1.msra.mxu0 %v1508
  %1510 = vmatprep.subr.mxu0 0.0
  %v1511 = vand.u32 %v1406, 4294901760
  %v1512 = vsub.f32 %v1406, %v1511
  %v1513 = vand.u32 %v1512, 4294901760
  %v1514 = vsub.f32 %v1512, %v1513
  %v1515 = vand.u32 %v1514, 4294901760
  %1516 = vmatpush1.msra.mxu0 %v1515
  %1517 = vmatprep.subr.mxu0 0.0
  %1518 = vmatpush1.msra.mxu0 0.0
  %1519 = vmatprep.subr.mxu0 0.0
  %1520 = vmatpush1.msra.mxu0 0.0
  %1521 = vmatprep.subr.mxu0 0.0
  %1522 = vmatpush1.msra.mxu0 0.0
  %1523 = vmatprep.subr.mxu0 0.0
  %1524 = vmatpush1.msra.mxu0 0.0
  %1525 = vmatprep.subr.mxu0 0.0
  %1526 = vmatpush1.msra.mxu0 0.0
  %1527 = vmatprep.subr.mxu0 0.0
  %1528 = vmatpush1.msra.mxu0 0.0
  %1529 = vmatprep.subr.mxu0 0.0
  %1530 = vmatpush1.msra.mxu0 0.0
  %1531 = vmatprep.subr.mxu0 0.0
  %1532 = vmatpush1.msra.mxu0 0.0
  %1533 = vmatprep.subr.mxu0 0.0
  %1534 = vmatpush1.msra.mxu0 0.0
  %1535 = vmatprep.subr.mxu0 0.0
  %1536 = vmatpush1.msra.mxu0 0.0
  %1537 = vmatprep.subr.mxu0 0.0
  %1538 = vmatpush1.msra.mxu0 0.0
  %1539 = vmatprep.subr.mxu0 0.0
  %1540 = vmatpush1.msra.mxu0 0.0
  %1541 = vmatprep.subr.mxu0 0.0
  %1542 = vmatpush1.msra.mxu0 0.0
  %1543 = vmatprep.subr.mxu0 0.0
  %1544 = vmatpush1.msra.mxu0 0.0
  %1545 = vmatprep.subr.mxu0 0.0
  %1546 = vmatpush1.msra.mxu0 0.0
  %1547 = vmatprep.subr.mxu0 0.0
  %1548 = vmatpush1.msra.mxu0 0.0
  %1549 = vmatprep.subr.mxu0 0.0
  %1550 = vmatpush1.msra.mxu0 0.0
  %1551 = vmatprep.subr.mxu0 0.0
  %1552 = vmatpush1.msra.mxu0 0.0
  %1553 = vmatprep.subr.mxu0 0.0
  %1554 = vmatpush1.msra.mxu0 0.0
  %1555 = vmatprep.subr.mxu0 0.0
  %1556 = vmatpush1.msra.mxu0 0.0
  %1557 = vmatprep.subr.mxu0 0.0
  %1558 = vmatpush1.msra.mxu0 0.0
  %1559 = vmatprep.subr.mxu0 0.0
  %1560 = vmatpush1.msra.mxu0 0.0
  %1561 = vmatprep.subr.mxu0 0.0
  %1562 = vmatpush1.msra.mxu0 0.0
  %1563 = vmatprep.subr.mxu0 0.0
  %1564 = vmatpush1.msra.mxu0 0.0
  %1565 = vmatprep.subr.mxu0 0.0
  %1566 = vmatpush1.msra.mxu0 0.0
  %1567 = vmatprep.subr.mxu0 0.0
  %1568 = vmatpush1.msra.mxu0 0.0
  %1569 = vmatprep.subr.mxu0 0.0
  %1570 = vmatpush1.msra.mxu0 0.0
  %1571 = vmatprep.subr.mxu0 0.0
  %1572 = vmatpush1.msra.mxu0 0.0
  %1573 = vmatprep.mubr.f32.mxu0 0.0
  %v1574 = vand.u32 %v1408, 4294901760
  %1575 = vmatmul.mubr.f32.gmra.mrb[0].mxu0 %v1574
  %v1576 = vpop.f32.mrb[0].mxu0
  %v1577 = vadd.f32 %v1486, %v1576
  %v1578 = vpop.f32.mrb[0].mxu0
  %1579 = vdwg.mxu0
  %1580 = vmatprep.subr.mxu0 0.0
  %v1581 = vand.u32 %v1403, 4294901760
  %v1582 = vsub.f32 %v1403, %v1581
  %1583 = vmatpush1.msra.mxu0 %v1582
  %1584 = vmatprep.subr.mxu0 0.0
  %v1585 = vand.u32 %v1404, 4294901760
  %v1586 = vsub.f32 %v1404, %v1585
  %1587 = vmatpush1.msra.mxu0 %v1586
  %1588 = vmatprep.subr.mxu0 0.0
  %v1589 = vand.u32 %v1405, 4294901760
  %v1590 = vsub.f32 %v1405, %v1589
  %1591 = vmatpush1.msra.mxu0 %v1590
  %1592 = vmatprep.subr.mxu0 0.0
  %v1593 = vand.u32 %v1406, 4294901760
  %v1594 = vsub.f32 %v1406, %v1593
  %1595 = vmatpush1.msra.mxu0 %v1594
  %1596 = vmatprep.subr.mxu0 0.0
  %1597 = vmatpush1.msra.mxu0 0.0
  %1598 = vmatprep.subr.mxu0 0.0
  %1599 = vmatpush1.msra.mxu0 0.0
  %1600 = vmatprep.subr.mxu0 0.0
  %1601 = vmatpush1.msra.mxu0 0.0
  %1602 = vmatprep.subr.mxu0 0.0
  %1603 = vmatpush1.msra.mxu0 0.0
  %1604 = vmatprep.subr.mxu0 0.0
  %1605 = vmatpush1.msra.mxu0 0.0
  %1606 = vmatprep.subr.mxu0 0.0
  %1607 = vmatpush1.msra.mxu0 0.0
  %1608 = vmatprep.subr.mxu0 0.0
  %1609 = vmatpush1.msra.mxu0 0.0
  %1610 = vmatprep.subr.mxu0 0.0
  %1611 = vmatpush1.msra.mxu0 0.0
  %1612 = vmatprep.subr.mxu0 0.0
  %1613 = vmatpush1.msra.mxu0 0.0
  %1614 = vmatprep.subr.mxu0 0.0
  %1615 = vmatpush1.msra.mxu0 0.0
  %1616 = vmatprep.subr.mxu0 0.0
  %1617 = vmatpush1.msra.mxu0 0.0
  %1618 = vmatprep.subr.mxu0 0.0
  %1619 = vmatpush1.msra.mxu0 0.0
  %1620 = vmatprep.subr.mxu0 0.0
  %1621 = vmatpush1.msra.mxu0 0.0
  %1622 = vmatprep.subr.mxu0 0.0
  %1623 = vmatpush1.msra.mxu0 0.0
  %1624 = vmatprep.subr.mxu0 0.0
  %1625 = vmatpush1.msra.mxu0 0.0
  %1626 = vmatprep.subr.mxu0 0.0
  %1627 = vmatpush1.msra.mxu0 0.0
  %1628 = vmatprep.subr.mxu0 0.0
  %1629 = vmatpush1.msra.mxu0 0.0
  %1630 = vmatprep.subr.mxu0 0.0
  %1631 = vmatpush1.msra.mxu0 0.0
  %1632 = vmatprep.subr.mxu0 0.0
  %1633 = vmatpush1.msra.mxu0 0.0
  %1634 = vmatprep.subr.mxu0 0.0
  %1635 = vmatpush1.msra.mxu0 0.0
  %1636 = vmatprep.subr.mxu0 0.0
  %1637 = vmatpush1.msra.mxu0 0.0
  %1638 = vmatprep.subr.mxu0 0.0
  %1639 = vmatpush1.msra.mxu0 0.0
  %1640 = vmatprep.subr.mxu0 0.0
  %1641 = vmatpush1.msra.mxu0 0.0
  %1642 = vmatprep.subr.mxu0 0.0
  %1643 = vmatpush1.msra.mxu0 0.0
  %1644 = vmatprep.subr.mxu0 0.0
  %1645 = vmatpush1.msra.mxu0 0.0
  %1646 = vmatprep.subr.mxu0 0.0
  %1647 = vmatpush1.msra.mxu0 0.0
  %1648 = vmatprep.subr.mxu0 0.0
  %1649 = vmatpush1.msra.mxu0 0.0
  %1650 = vmatprep.subr.mxu0 0.0
  %1651 = vmatpush1.msra.mxu0 0.0
  %1652 = vmatprep.mubr.f32.mxu0 0.0
  %v1653 = vand.u32 %v1408, 4294901760
  %v1654 = vsub.f32 %v1408, %v1653
  %1655 = vmatmul.mubr.f32.gmra.mrb[0].mxu0 %v1654
  %v1656 = vpop.f32.mrb[0].mxu0
  %v1657 = vadd.f32 %v1577, %v1656
  %v1658 = vpop.f32.mrb[0].mxu0
  %1659 = vdwg.mxu0
  %1660 = vmatprep.subr.mxu0 0.0
  %v1661 = vand.u32 %v1403, 4294901760
  %1662 = vmatpush1.msra.mxu0 %v1661
  %1663 = vmatprep.subr.mxu0 0.0
  %v1664 = vand.u32 %v1404, 4294901760
  %1665 = vmatpush1.msra.mxu0 %v1664
  %1666 = vmatprep.subr.mxu0 0.0
  %v1667 = vand.u32 %v1405, 4294901760
  %1668 = vmatpush1.msra.mxu0 %v1667
  %1669 = vmatprep.subr.mxu0 0.0
  %v1670 = vand.u32 %v1406, 4294901760
  %1671 = vmatpush1.msra.mxu0 %v1670
  %1672 = vmatprep.subr.mxu0 0.0
  %1673 = vmatpush1.msra.mxu0 0.0
  %1674 = vmatprep.subr.mxu0 0.0
  %1675 = vmatpush1.msra.mxu0 0.0
  %1676 = vmatprep.subr.mxu0 0.0
  %1677 = vmatpush1.msra.mxu0 0.0
  %1678 = vmatprep.subr.mxu0 0.0
  %1679 = vmatpush1.msra.mxu0 0.0
  %1680 = vmatprep.subr.mxu0 0.0
  %1681 = vmatpush1.msra.mxu0 0.0
  %1682 = vmatprep.subr.mxu0 0.0
  %1683 = vmatpush1.msra.mxu0 0.0
  %1684 = vmatprep.subr.mxu0 0.0
  %1685 = vmatpush1.msra.mxu0 0.0
  %1686 = vmatprep.subr.mxu0 0.0
  %1687 = vmatpush1.msra.mxu0 0.0
  %1688 = vmatprep.subr.mxu0 0.0
  %1689 = vmatpush1.msra.mxu0 0.0
  %1690 = vmatprep.subr.mxu0 0.0
  %1691 = vmatpush1.msra.mxu0 0.0
  %1692 = vmatprep.subr.mxu0 0.0
  %1693 = vmatpush1.msra.mxu0 0.0
  %1694 = vmatprep.subr.mxu0 0.0
  %1695 = vmatpush1.msra.mxu0 0.0
  %1696 = vmatprep.subr.mxu0 0.0
  %1697 = vmatpush1.msra.mxu0 0.0
  %1698 = vmatprep.subr.mxu0 0.0
  %1699 = vmatpush1.msra.mxu0 0.0
  %1700 = vmatprep.subr.mxu0 0.0
  %1701 = vmatpush1.msra.mxu0 0.0
  %1702 = vmatprep.subr.mxu0 0.0
  %1703 = vmatpush1.msra.mxu0 0.0
  %1704 = vmatprep.subr.mxu0 0.0
  %1705 = vmatpush1.msra.mxu0 0.0
  %1706 = vmatprep.subr.mxu0 0.0
  %1707 = vmatpush1.msra.mxu0 0.0
  %1708 = vmatprep.subr.mxu0 0.0
  %1709 = vmatpush1.msra.mxu0 0.0
  %1710 = vmatprep.subr.mxu0 0.0
  %1711 = vmatpush1.msra.mxu0 0.0
  %1712 = vmatprep.subr.mxu0 0.0
  %1713 = vmatpush1.msra.mxu0 0.0
  %1714 = vmatprep.subr.mxu0 0.0
  %1715 = vmatpush1.msra.mxu0 0.0
  %1716 = vmatprep.subr.mxu0 0.0
  %1717 = vmatpush1.msra.mxu0 0.0
  %1718 = vmatprep.subr.mxu0 0.0
  %1719 = vmatpush1.msra.mxu0 0.0
  %1720 = vmatprep.subr.mxu0 0.0
  %1721 = vmatpush1.msra.mxu0 0.0
  %1722 = vmatprep.subr.mxu0 0.0
  %1723 = vmatpush1.msra.mxu0 0.0
  %1724 = vmatprep.subr.mxu0 0.0
  %1725 = vmatpush1.msra.mxu0 0.0
  %1726 = vmatprep.subr.mxu0 0.0
  %1727 = vmatpush1.msra.mxu0 0.0
  %1728 = vmatprep.mubr.f32.mxu0 0.0
  %v1729 = vand.u32 %v1408, 4294901760
  %v1730 = vsub.f32 %v1408, %v1729
  %v1731 = vand.u32 %v1730, 4294901760
  %1732 = vmatmul.mubr.f32.gmra.mrb[0].mxu0 %v1731
  %v1733 = vpop.f32.mrb[0].mxu0
  %v1734 = vadd.f32 %v1657, %v1733
  %v1735 = vpop.f32.mrb[0].mxu0
  %1736 = vdwg.mxu0
  %1737 = vmatprep.subr.mxu0 0.0
  %v1738 = vand.u32 %v1403, 4294901760
  %v1739 = vsub.f32 %v1403, %v1738
  %v1740 = vand.u32 %v1739, 4294901760
  %1741 = vmatpush1.msra.mxu0 %v1740
  %1742 = vmatprep.subr.mxu0 0.0
  %v1743 = vand.u32 %v1404, 4294901760
  %v1744 = vsub.f32 %v1404, %v1743
  %v1745 = vand.u32 %v1744, 4294901760
  %1746 = vmatpush1.msra.mxu0 %v1745
  %1747 = vmatprep.subr.mxu0 0.0
  %v1748 = vand.u32 %v1405, 4294901760
  %v1749 = vsub.f32 %v1405, %v1748
  %v1750 = vand.u32 %v1749, 4294901760
  %1751 = vmatpush1.msra.mxu0 %v1750
  %1752 = vmatprep.subr.mxu0 0.0
  %v1753 = vand.u32 %v1406, 4294901760
  %v1754 = vsub.f32 %v1406, %v1753
  %v1755 = vand.u32 %v1754, 4294901760
  %1756 = vmatpush1.msra.mxu0 %v1755
  %1757 = vmatprep.subr.mxu0 0.0
  %1758 = vmatpush1.msra.mxu0 0.0
  %1759 = vmatprep.subr.mxu0 0.0
  %1760 = vmatpush1.msra.mxu0 0.0
  %1761 = vmatprep.subr.mxu0 0.0
  %1762 = vmatpush1.msra.mxu0 0.0
  %1763 = vmatprep.subr.mxu0 0.0
  %1764 = vmatpush1.msra.mxu0 0.0
  %1765 = vmatprep.subr.mxu0 0.0
  %1766 = vmatpush1.msra.mxu0 0.0
  %1767 = vmatprep.subr.mxu0 0.0
  %1768 = vmatpush1.msra.mxu0 0.0
  %1769 = vmatprep.subr.mxu0 0.0
  %1770 = vmatpush1.msra.mxu0 0.0
  %1771 = vmatprep.subr.mxu0 0.0
  %1772 = vmatpush1.msra.mxu0 0.0
  %1773 = vmatprep.subr.mxu0 0.0
  %1774 = vmatpush1.msra.mxu0 0.0
  %1775 = vmatprep.subr.mxu0 0.0
  %1776 = vmatpush1.msra.mxu0 0.0
  %1777 = vmatprep.subr.mxu0 0.0
  %1778 = vmatpush1.msra.mxu0 0.0
  %1779 = vmatprep.subr.mxu0 0.0
  %1780 = vmatpush1.msra.mxu0 0.0
  %1781 = vmatprep.subr.mxu0 0.0
  %1782 = vmatpush1.msra.mxu0 0.0
  %1783 = vmatprep.subr.mxu0 0.0
  %1784 = vmatpush1.msra.mxu0 0.0
  %1785 = vmatprep.subr.mxu0 0.0
  %1786 = vmatpush1.msra.mxu0 0.0
  %1787 = vmatprep.subr.mxu0 0.0
  %1788 = vmatpush1.msra.mxu0 0.0
  %1789 = vmatprep.subr.mxu0 0.0
  %1790 = vmatpush1.msra.mxu0 0.0
  %1791 = vmatprep.subr.mxu0 0.0
  %1792 = vmatpush1.msra.mxu0 0.0
  %1793 = vmatprep.subr.mxu0 0.0
  %1794 = vmatpush1.msra.mxu0 0.0
  %1795 = vmatprep.subr.mxu0 0.0
  %1796 = vmatpush1.msra.mxu0 0.0
  %1797 = vmatprep.subr.mxu0 0.0
  %1798 = vmatpush1.msra.mxu0 0.0
  %1799 = vmatprep.subr.mxu0 0.0
  %1800 = vmatpush1.msra.mxu0 0.0
  %1801 = vmatprep.subr.mxu0 0.0
  %1802 = vmatpush1.msra.mxu0 0.0
  %1803 = vmatprep.subr.mxu0 0.0
  %1804 = vmatpush1.msra.mxu0 0.0
  %1805 = vmatprep.subr.mxu0 0.0
  %1806 = vmatpush1.msra.mxu0 0.0
  %1807 = vmatprep.subr.mxu0 0.0
  %1808 = vmatpush1.msra.mxu0 0.0
  %1809 = vmatprep.subr.mxu0 0.0
  %1810 = vmatpush1.msra.mxu0 0.0
  %1811 = vmatprep.subr.mxu0 0.0
  %1812 = vmatpush1.msra.mxu0 0.0
  %1813 = vmatprep.mubr.f32.mxu0 0.0
  %v1814 = vand.u32 %v1408, 4294901760
  %1815 = vmatmul.mubr.f32.gmra.mrb[0].mxu0 %v1814
  %v1816 = vpop.f32.mrb[0].mxu0
  %v1817 = vadd.f32 %v1734, %v1816
  %v1818 = vpop.f32.mrb[0].mxu0
  %1819 = vdwg.mxu0
  %1820 = vmatprep.subr.mxu0 0.0
  %v1821 = vand.u32 %v1403, 4294901760
  %1822 = vmatpush1.msra.mxu0 %v1821
  %1823 = vmatprep.subr.mxu0 0.0
  %v1824 = vand.u32 %v1404, 4294901760
  %1825 = vmatpush1.msra.mxu0 %v1824
  %1826 = vmatprep.subr.mxu0 0.0
  %v1827 = vand.u32 %v1405, 4294901760
  %1828 = vmatpush1.msra.mxu0 %v1827
  %1829 = vmatprep.subr.mxu0 0.0
  %v1830 = vand.u32 %v1406, 4294901760
  %1831 = vmatpush1.msra.mxu0 %v1830
  %1832 = vmatprep.subr.mxu0 0.0
  %1833 = vmatpush1.msra.mxu0 0.0
  %1834 = vmatprep.subr.mxu0 0.0
  %1835 = vmatpush1.msra.mxu0 0.0
  %1836 = vmatprep.subr.mxu0 0.0
  %1837 = vmatpush1.msra.mxu0 0.0
  %1838 = vmatprep.subr.mxu0 0.0
  %1839 = vmatpush1.msra.mxu0 0.0
  %1840 = vmatprep.subr.mxu0 0.0
  %1841 = vmatpush1.msra.mxu0 0.0
  %1842 = vmatprep.subr.mxu0 0.0
  %1843 = vmatpush1.msra.mxu0 0.0
  %1844 = vmatprep.subr.mxu0 0.0
  %1845 = vmatpush1.msra.mxu0 0.0
  %1846 = vmatprep.subr.mxu0 0.0
  %1847 = vmatpush1.msra.mxu0 0.0
  %1848 = vmatprep.subr.mxu0 0.0
  %1849 = vmatpush1.msra.mxu0 0.0
  %1850 = vmatprep.subr.mxu0 0.0
  %1851 = vmatpush1.msra.mxu0 0.0
  %1852 = vmatprep.subr.mxu0 0.0
  %1853 = vmatpush1.msra.mxu0 0.0
  %1854 = vmatprep.subr.mxu0 0.0
  %1855 = vmatpush1.msra.mxu0 0.0
  %1856 = vmatprep.subr.mxu0 0.0
  %1857 = vmatpush1.msra.mxu0 0.0
  %1858 = vmatprep.subr.mxu0 0.0
  %1859 = vmatpush1.msra.mxu0 0.0
  %1860 = vmatprep.subr.mxu0 0.0
  %1861 = vmatpush1.msra.mxu0 0.0
  %1862 = vmatprep.subr.mxu0 0.0
  %1863 = vmatpush1.msra.mxu0 0.0
  %1864 = vmatprep.subr.mxu0 0.0
  %1865 = vmatpush1.msra.mxu0 0.0
  %1866 = vmatprep.subr.mxu0 0.0
  %1867 = vmatpush1.msra.mxu0 0.0
  %1868 = vmatprep.subr.mxu0 0.0
  %1869 = vmatpush1.msra.mxu0 0.0
  %1870 = vmatprep.subr.mxu0 0.0
  %1871 = vmatpush1.msra.mxu0 0.0
  %1872 = vmatprep.subr.mxu0 0.0
  %1873 = vmatpush1.msra.mxu0 0.0
  %1874 = vmatprep.subr.mxu0 0.0
  %1875 = vmatpush1.msra.mxu0 0.0
  %1876 = vmatprep.subr.mxu0 0.0
  %1877 = vmatpush1.msra.mxu0 0.0
  %1878 = vmatprep.subr.mxu0 0.0
  %1879 = vmatpush1.msra.mxu0 0.0
  %1880 = vmatprep.subr.mxu0 0.0
  %1881 = vmatpush1.msra.mxu0 0.0
  %1882 = vmatprep.subr.mxu0 0.0
  %1883 = vmatpush1.msra.mxu0 0.0
  %1884 = vmatprep.subr.mxu0 0.0
  %1885 = vmatpush1.msra.mxu0 0.0
  %1886 = vmatprep.subr.mxu0 0.0
  %1887 = vmatpush1.msra.mxu0 0.0
  %1888 = vmatprep.mubr.f32.mxu0 0.0
  %v1889 = vand.u32 %v1408, 4294901760
  %1890 = vmatmul.mubr.f32.gmra.mrb[0].mxu0 %v1889
  %v1891 = vpop.f32.mrb[0].mxu0
  %v1892 = vadd.f32 %v1817, %v1891
  %v1893 = vpop.f32.mrb[0].mxu0
  %1894 = vdwg.mxu0
  %1895 = vst [vmem:[%s6] sm:$0xff] %v1395
  %v1896 = vsub.f32 0.0, %v1892
  %1897 = vst [vmem:[%s6] sm:$0x1] %v1896
  // Predicated region
  $region26: #{cnf.1} parent=0 // pred_check
    _
  $region27: #{cnf.1} parent=0 // pred_check_branch
    %1899 = sbr.rel (0) target = $region29
  $region28: #{cnf.1} parent=0 // pred_region
    _
  $region29: #{cnf.1} parent=0 // pred_fallthru
    _
  // Predicated region
  $region30: #{cnf.1} parent=0 // pred_check
    _
  $region31: #{cnf.1} parent=0 // pred_check_branch
    %1901 = sbr.rel (0) target = $region33
  $region32: #{cnf.1} parent=0 // pred_region
    _
  $region33: #{cnf.1} parent=0 // pred_fallthru
    _

</llo_original>
